<compile_context>
chip_gen: v5e
topology: v5e:2x2
jax: 0.10.0
libtpu: 0.0.40
codegen_flags: <defaults>
</compile_context>

<pallas_src>
import functools

import jax
import jax.numpy as jnp
from jax.experimental import pallas as pl
from jax.experimental.pallas import tpu as pltpu


def _build_lhs(x_img, kh, kw, sh, sw, Ho, Wo, C_in):
    """K-packed im2col LHS: (Ho*Wo, kh*kw*C_in), ReLU applied once, bf16.

    ReLU is applied to the K-packed windows (kh*kw*C_in lanes dense) rather than
    the raw C_in-lane image; elementwise ReLU commutes with the window gather
    (padding zeros are ReLU-invariant), so results are identical.
    """
    cols = []
    for i in range(kh):                      # static unroll over the conv window
        for j in range(kw):
            cols.append(x_img[i:i + sh * (Ho - 1) + 1:sh,
                              j:j + sw * (Wo - 1) + 1:sw, :])   # (Ho, Wo, C_in)
    win = jnp.concatenate(cols, axis=-1)                         # (Ho, Wo, K)
    return jnp.maximum(win, 0).reshape(Ho * Wo, kh * kw * C_in)  # (HoWo, K)


def _make_stats_kernel(kh, kw, sh, sw, Ho, Wo, C_in):
    def kernel(x_ref, w_ref, psum_ref, psq_ref):
        # x_ref: (1, Hp, Wp, C_in) bf16, one spatially pre-padded image
        # w_ref: (K, Cp) bf16, K-packed weights, output channels padded to 128 lanes
        lhs = _build_lhs(x_ref[0], kh, kw, sh, sw, Ho, Wo, C_in)
        acc = jnp.dot(lhs, w_ref[...], preferred_element_type=jnp.float32)
        Cp = acc.shape[1]
        # Per-image BN partials in f32; reduced across the (parallel) grid axis
        # outside the kernel.  No conv intermediate is written to HBM.
        psum_ref[...] = jnp.sum(acc, axis=0, keepdims=True).reshape(1, 1, Cp)
        psq_ref[...] = jnp.sum(acc * acc, axis=0, keepdims=True).reshape(1, 1, Cp)
    return kernel


def _make_apply_kernel(kh, kw, sh, sw, Ho, Wo, C_in, C_out):
    HoWo = Ho * Wo

    def kernel(x_ref, w_ref, scale_ref, shift_ref, o_ref):
        # Recompute the conv tile (same bf16 contraction as the stats pass ->
        # bit-identical to the values the statistics were computed from).
        lhs = _build_lhs(x_ref[0], kh, kw, sh, sw, Ho, Wo, C_in)
        acc = jnp.dot(lhs, w_ref[...], preferred_element_type=jnp.float32)
        y = acc * scale_ref[...] + shift_ref[...]          # (HoWo, Cp) f32
        yt = jnp.transpose(y)                              # (Cp, HoWo) via XLU
        # Fold the channel-pad slice and the NHWC->NCHW transpose into the kernel:
        # write a lane-dense (C_out, HoWo) slab (HoWo is a multiple of 128 here).
        o_ref[0] = yt[:C_out, :].astype(o_ref.dtype)
    return kernel


def relu_conv_bn(x_nchw, w_conv, gamma, beta, *, stride, padding, eps=1e-5):
    N, C_in, H, W = x_nchw.shape
    C_out, _, kh, kw = w_conv.shape
    sh = sw = stride
    Ho = (H + 2 * padding - kh) // sh + 1
    Wo = (W + 2 * padding - kw) // sw + 1
    Hp, Wp = H + 2 * padding, W + 2 * padding
    HoWo = Ho * Wo
    M = N * HoWo
    K = kh * kw * C_in                                  # packed contraction depth
    Cp = ((C_out + 127) // 128) * 128                   # lane-dense padded channels

    # ---- layout plumbing: NCHW -> padded NHWC bf16; weights -> (K, Cp) bf16 ----
    x = jnp.transpose(x_nchw, (0, 2, 3, 1))
    x = jnp.pad(x, ((0, 0), (padding, padding), (padding, padding), (0, 0)))
    # ReLU is applied inside the kernels AFTER this bf16 cast; that is numerically
    # equivalent (ReLU is monotone and sign-preserving), not a double rounding.
    x = x.astype(jnp.bfloat16)
    wt = jnp.transpose(w_conv, (2, 3, 1, 0))            # (kh, kw, C_in, C_out)
    wt = jnp.pad(wt, ((0, 0), (0, 0), (0, 0), (0, Cp - C_out)))
    w2 = wt.reshape(K, Cp).astype(jnp.bfloat16)         # row = (i*kw + j)*C_in + ci

    # ---- pass 1: fused ReLU + K-packed conv, BN partials only (no y writeback) ----
    psum, psq = pl.pallas_call(
        _make_stats_kernel(kh, kw, sh, sw, Ho, Wo, C_in),
        out_shape=(jax.ShapeDtypeStruct((N, 1, Cp), jnp.float32),
                   jax.ShapeDtypeStruct((N, 1, Cp), jnp.float32)),
        grid_spec=pltpu.PrefetchScalarGridSpec(
            num_scalar_prefetch=0,
            grid=(N,),
            in_specs=[pl.BlockSpec((1, Hp, Wp, C_in), lambda n: (n, 0, 0, 0)),
                      pl.BlockSpec((K, Cp), lambda n: (0, 0))],
            out_specs=[pl.BlockSpec((1, 1, Cp), lambda n: (n, 0, 0)),
                       pl.BlockSpec((1, 1, Cp), lambda n: (n, 0, 0))],
        ),
        compiler_params=pltpu.CompilerParams(dimension_semantics=("parallel",)),
    )(x, w2)

    # ---- tiny (Cp,) BN finalize in plain JAX ----
    # Biased variance (divide by M) matches PyTorch BatchNorm training-mode
    # normalization.  Variance uses E[x^2]-E[x]^2 in f32; fine at these scales
    # (use a shifted two-pass variance if reused with large-mean activations).
    s1 = jnp.sum(psum, axis=(0, 1))
    s2 = jnp.sum(psq, axis=(0, 1))
    mean = s1 / M
    var = jnp.maximum(s2 / M - mean * mean, 0.0)
    gamma_p = jnp.pad(gamma.astype(jnp.float32), (0, Cp - C_out),
                      constant_values=1.0)
    beta_p = jnp.pad(beta.astype(jnp.float32), (0, Cp - C_out))
    scale = (gamma_p * jax.lax.rsqrt(var + eps)).reshape(1, Cp)
    shift = (beta_p - mean * scale[0]).reshape(1, Cp)

    # ---- pass 2: recompute conv tile, apply scale/shift, write NCHW directly ----
    out = pl.pallas_call(
        _make_apply_kernel(kh, kw, sh, sw, Ho, Wo, C_in, C_out),
        out_shape=jax.ShapeDtypeStruct((N, C_out, HoWo), jnp.float32),
        grid_spec=pltpu.PrefetchScalarGridSpec(
            num_scalar_prefetch=0,
            grid=(N,),
            in_specs=[pl.BlockSpec((1, Hp, Wp, C_in), lambda n: (n, 0, 0, 0)),
                      pl.BlockSpec((K, Cp), lambda n: (0, 0)),
                      pl.BlockSpec((1, Cp), lambda n: (0, 0)),
                      pl.BlockSpec((1, Cp), lambda n: (0, 0))],
            out_specs=pl.BlockSpec((1, C_out, HoWo), lambda n: (n, 0, 0)),
        ),
        compiler_params=pltpu.CompilerParams(dimension_semantics=("parallel",)),
    )(x, w2, scale, shift)

    # (N, C_out, Ho*Wo) -> (N, C_out, Ho, Wo): row-major split, bitcast-free.
    return out.reshape(N, C_out, Ho, Wo)


def reference(x_nchw, w_conv, gamma, beta, *, stride, padding, eps=1e-5):
    # Pure-JAX (f32) reference for correctness checking.
    xr = jnp.maximum(x_nchw, 0.0)
    conv = jax.lax.conv_general_dilated(
        xr, w_conv, window_strides=(stride, stride),
        padding=[(padding, padding), (padding, padding)],
        dimension_numbers=("NCHW", "OIHW", "NCHW"))
    mean = jnp.mean(conv, axis=(0, 2, 3), keepdims=True)
    var = jnp.mean((conv - mean) ** 2, axis=(0, 2, 3), keepdims=True)
    g = gamma.reshape(1, -1, 1, 1)
    b = beta.reshape(1, -1, 1, 1)
    return (conv - mean) * jax.lax.rsqrt(var + eps) * g + b


if __name__ == "__main__":
    # Module config: ReLUConvBN(C_in=4, C_out=8, kernel_size=3, stride=1, padding=1,
    #                           affine=True, use_ABN=False)
    N, C_in, C_out, H, W = 2, 4, 8, 16, 16
    kh = kw = 3
    stride, padding = 1, 1

    key = jax.random.PRNGKey(0)
    kx, kw_key = jax.random.split(key)

    x = jax.random.normal(kx, (N, C_in, H, W), dtype=jnp.float32)

    # Conv weight: kaiming_normal_ (fan_in, gain=sqrt(2)), deterministic.
    fan_in = C_in * kh * kw
    w_conv = jax.random.normal(kw_key, (C_out, C_in, kh, kw), dtype=jnp.float32) \
             * jnp.sqrt(2.0 / fan_in)

    # BatchNorm2d(affine=True) init: weight=1, bias=0.
    gamma = jnp.ones((C_out,), dtype=jnp.float32)
    beta = jnp.zeros((C_out,), dtype=jnp.float32)

    fwd = jax.jit(functools.partial(relu_conv_bn, stride=stride, padding=padding))
    out = jax.block_until_ready(fwd(x, w_conv, gamma, beta))

    ref = reference(x, w_conv, gamma, beta, stride=stride, padding=padding)
    assert out.shape == (N, C_out, H, W)
    # bf16 matmul operands (f32 accumulation) -> loosened tolerance vs f32 reference.
    assert jnp.allclose(out, ref, atol=5e-2, rtol=5e-2), "mismatch vs reference"

    print("KERNEL_OK")
</pallas_src>

<mosaic_0001>
module attributes {stable_mosaic.version = 11 : i64} {
  func.func @kernel(%arg0: i32, %arg1: memref<1x18x18x4xbf16, #tpu.memory_space<vmem>>, %arg2: memref<36x128xbf16, #tpu.memory_space<vmem>>, %arg3: memref<1x1x128xf32, #tpu.memory_space<vmem>>, %arg4: memref<1x1x128xf32, #tpu.memory_space<vmem>>) attributes {dimension_semantics = [#tpu.dimension_semantics<parallel>], iteration_bounds = array<i64: 2>, scalar_prefetch = 0 : i64, scratch_operands = 0 : i64, tpu.core_type = #tpu.core_type<tc>, window_params = [{transform_indices = @transform_0, window_bounds = array<i64: 1, 18, 18, 4>}, {pipeline_mode = #tpu.pipeline_mode<synchronous>, transform_indices = @transform_1, window_bounds = array<i64: 36, 128>}, {transform_indices = @transform_2, window_bounds = array<i64: 1, 1, 128>}, {transform_indices = @transform_3, window_bounds = array<i64: 1, 1, 128>}]} {
    %c0 = arith.constant 0 : index
    %c0_0 = arith.constant 0 : index
    %c0_1 = arith.constant 0 : index
    %c0_2 = arith.constant 0 : index
    %0 = vector.load %arg1[%c0, %c0_0, %c0_1, %c0_2] : memref<1x18x18x4xbf16, #tpu.memory_space<vmem>>, vector<1x18x18x4xbf16>
    %1 = vector.shape_cast %0 : vector<1x18x18x4xbf16> to vector<18x18x4xbf16>
    %2 = vector.extract_strided_slice %1 {offsets = [0, 0, 0], sizes = [16, 16, 4], strides = [1, 1, 1]} : vector<18x18x4xbf16> to vector<16x16x4xbf16>
    %3 = vector.extract_strided_slice %1 {offsets = [0, 1, 0], sizes = [16, 16, 4], strides = [1, 1, 1]} : vector<18x18x4xbf16> to vector<16x16x4xbf16>
    %4 = vector.extract_strided_slice %1 {offsets = [0, 2, 0], sizes = [16, 16, 4], strides = [1, 1, 1]} : vector<18x18x4xbf16> to vector<16x16x4xbf16>
    %5 = vector.extract_strided_slice %1 {offsets = [1, 0, 0], sizes = [16, 16, 4], strides = [1, 1, 1]} : vector<18x18x4xbf16> to vector<16x16x4xbf16>
    %6 = vector.extract_strided_slice %1 {offsets = [1, 1, 0], sizes = [16, 16, 4], strides = [1, 1, 1]} : vector<18x18x4xbf16> to vector<16x16x4xbf16>
    %7 = vector.extract_strided_slice %1 {offsets = [1, 2, 0], sizes = [16, 16, 4], strides = [1, 1, 1]} : vector<18x18x4xbf16> to vector<16x16x4xbf16>
    %8 = vector.extract_strided_slice %1 {offsets = [2, 0, 0], sizes = [16, 16, 4], strides = [1, 1, 1]} : vector<18x18x4xbf16> to vector<16x16x4xbf16>
    %9 = vector.extract_strided_slice %1 {offsets = [2, 1, 0], sizes = [16, 16, 4], strides = [1, 1, 1]} : vector<18x18x4xbf16> to vector<16x16x4xbf16>
    %10 = vector.extract_strided_slice %1 {offsets = [2, 2, 0], sizes = [16, 16, 4], strides = [1, 1, 1]} : vector<18x18x4xbf16> to vector<16x16x4xbf16>
    %11 = tpu.concatenate %2, %3, %4, %5, %6, %7, %8, %9, %10 in 2 : vector<16x16x4xbf16>, vector<16x16x4xbf16>, vector<16x16x4xbf16>, vector<16x16x4xbf16>, vector<16x16x4xbf16>, vector<16x16x4xbf16>, vector<16x16x4xbf16>, vector<16x16x4xbf16>, vector<16x16x4xbf16> -> vector<16x16x36xbf16>
    %cst = arith.constant 0.000000e+00 : bf16
    %12 = vector.broadcast %cst : bf16 to vector<16x16x36xbf16>
    %13 = arith.maximumf %11, %12 : vector<16x16x36xbf16>
    %14 = vector.shape_cast %13 : vector<16x16x36xbf16> to vector<256x36xbf16>
    %c0_3 = arith.constant 0 : index
    %c0_4 = arith.constant 0 : index
    %15 = vector.load %arg2[%c0_3, %c0_4] : memref<36x128xbf16, #tpu.memory_space<vmem>>, vector<36x128xbf16>
    %cst_5 = arith.constant dense<0.000000e+00> : vector<256x128xf32>
    %16 = tpu.matmul %14, %15, %cst_5 {dimension_numbers = #tpu.dot_dimension_numbers<[1], [0], [0], [1], [0, 0, 1, 1], [], []>} : vector<256x36xbf16>, vector<36x128xbf16>, vector<256x128xf32> -> vector<256x128xf32>
    %cst_6 = arith.constant dense<0.000000e+00> : vector<128xf32>
    %17 = vector.multi_reduction <add>, %16, %cst_6 [0] : vector<256x128xf32> to vector<128xf32>
    %18 = vector.shape_cast %17 : vector<128xf32> to vector<1x128xf32>
    %19 = vector.shape_cast %18 : vector<1x128xf32> to vector<1x1x128xf32>
    %c0_7 = arith.constant 0 : index
    %c0_8 = arith.constant 0 : index
    %c0_9 = arith.constant 0 : index
    %20 = vector.load %arg3[%c0_7, %c0_8, %c0_9] : memref<1x1x128xf32, #tpu.memory_space<vmem>>, vector<1x1x128xf32>
    tpu.vector_store %arg3[%c0_7, %c0_8, %c0_9], %19 {strides = array<i32>} : memref<1x1x128xf32, #tpu.memory_space<vmem>>, vector<1x1x128xf32>,
    %21 = arith.mulf %16, %16 : vector<256x128xf32>
    %cst_10 = arith.constant dense<0.000000e+00> : vector<128xf32>
    %22 = vector.multi_reduction <add>, %21, %cst_10 [0] : vector<256x128xf32> to vector<128xf32>
    %23 = vector.shape_cast %22 : vector<128xf32> to vector<1x128xf32>
    %24 = vector.shape_cast %23 : vector<1x128xf32> to vector<1x1x128xf32>
    %c0_11 = arith.constant 0 : index
    %c0_12 = arith.constant 0 : index
    %c0_13 = arith.constant 0 : index
    %25 = vector.load %arg4[%c0_11, %c0_12, %c0_13] : memref<1x1x128xf32, #tpu.memory_space<vmem>>, vector<1x1x128xf32>
    tpu.vector_store %arg4[%c0_11, %c0_12, %c0_13], %24 {strides = array<i32>} : memref<1x1x128xf32, #tpu.memory_space<vmem>>, vector<1x1x128xf32>,
    return
  }
  func.func @transform_0(%arg0: i32) -> (i32, i32, i32, i32) {
    %c0_i32 = arith.constant 0 : i32
    %c0_i32_0 = arith.constant 0 : i32
    %c0_i32_1 = arith.constant 0 : i32
    %c0_i32_2 = arith.constant 0 : i32
    return %arg0, %c0_i32, %c0_i32_0, %c0_i32_1 : i32, i32, i32, i32
  }
  func.func @transform_1(%arg0: i32) -> (i32, i32) {
    %c0_i32 = arith.constant 0 : i32
    %c0_i32_0 = arith.constant 0 : i32
    %c0_i32_1 = arith.constant 0 : i32
    return %c0_i32, %c0_i32_0 : i32, i32
  }
  func.func @transform_2(%arg0: i32) -> (i32, i32, i32) {
    %c0_i32 = arith.constant 0 : i32
    %c0_i32_0 = arith.constant 0 : i32
    %c0_i32_1 = arith.constant 0 : i32
    return %arg0, %c0_i32, %c0_i32_0 : i32, i32, i32
  }
  func.func @transform_3(%arg0: i32) -> (i32, i32, i32) {
    %c0_i32 = arith.constant 0 : i32
    %c0_i32_0 = arith.constant 0 : i32
    %c0_i32_1 = arith.constant 0 : i32
    return %arg0, %c0_i32, %c0_i32_0 : i32, i32, i32
  }
}

module attributes {stable_mosaic.version = 11 : i64} {
  func.func @kernel(%arg0: i32, %arg1: memref<1x18x18x4xbf16, #tpu.memory_space<vmem>>, %arg2: memref<36x128xbf16, #tpu.memory_space<vmem>>, %arg3: memref<1x128xf32, #tpu.memory_space<vmem>>, %arg4: memref<1x128xf32, #tpu.memory_space<vmem>>, %arg5: memref<1x8x256xf32, #tpu.memory_space<vmem>>) attributes {dimension_semantics = [#tpu.dimension_semantics<parallel>], iteration_bounds = array<i64: 2>, scalar_prefetch = 0 : i64, scratch_operands = 0 : i64, tpu.core_type = #tpu.core_type<tc>, window_params = [{transform_indices = @transform_0, window_bounds = array<i64: 1, 18, 18, 4>}, {pipeline_mode = #tpu.pipeline_mode<synchronous>, transform_indices = @transform_1, window_bounds = array<i64: 36, 128>}, {pipeline_mode = #tpu.pipeline_mode<synchronous>, transform_indices = @transform_2, window_bounds = array<i64: 1, 128>}, {pipeline_mode = #tpu.pipeline_mode<synchronous>, transform_indices = @transform_3, window_bounds = array<i64: 1, 128>}, {transform_indices = @transform_4, window_bounds = array<i64: 1, 8, 256>}]} {
    %c0 = arith.constant 0 : index
    %c0_0 = arith.constant 0 : index
    %c0_1 = arith.constant 0 : index
    %c0_2 = arith.constant 0 : index
    %0 = vector.load %arg1[%c0, %c0_0, %c0_1, %c0_2] : memref<1x18x18x4xbf16, #tpu.memory_space<vmem>>, vector<1x18x18x4xbf16>
    %1 = vector.shape_cast %0 : vector<1x18x18x4xbf16> to vector<18x18x4xbf16>
    %2 = vector.extract_strided_slice %1 {offsets = [0, 0, 0], sizes = [16, 16, 4], strides = [1, 1, 1]} : vector<18x18x4xbf16> to vector<16x16x4xbf16>
    %3 = vector.extract_strided_slice %1 {offsets = [0, 1, 0], sizes = [16, 16, 4], strides = [1, 1, 1]} : vector<18x18x4xbf16> to vector<16x16x4xbf16>
    %4 = vector.extract_strided_slice %1 {offsets = [0, 2, 0], sizes = [16, 16, 4], strides = [1, 1, 1]} : vector<18x18x4xbf16> to vector<16x16x4xbf16>
    %5 = vector.extract_strided_slice %1 {offsets = [1, 0, 0], sizes = [16, 16, 4], strides = [1, 1, 1]} : vector<18x18x4xbf16> to vector<16x16x4xbf16>
    %6 = vector.extract_strided_slice %1 {offsets = [1, 1, 0], sizes = [16, 16, 4], strides = [1, 1, 1]} : vector<18x18x4xbf16> to vector<16x16x4xbf16>
    %7 = vector.extract_strided_slice %1 {offsets = [1, 2, 0], sizes = [16, 16, 4], strides = [1, 1, 1]} : vector<18x18x4xbf16> to vector<16x16x4xbf16>
    %8 = vector.extract_strided_slice %1 {offsets = [2, 0, 0], sizes = [16, 16, 4], strides = [1, 1, 1]} : vector<18x18x4xbf16> to vector<16x16x4xbf16>
    %9 = vector.extract_strided_slice %1 {offsets = [2, 1, 0], sizes = [16, 16, 4], strides = [1, 1, 1]} : vector<18x18x4xbf16> to vector<16x16x4xbf16>
    %10 = vector.extract_strided_slice %1 {offsets = [2, 2, 0], sizes = [16, 16, 4], strides = [1, 1, 1]} : vector<18x18x4xbf16> to vector<16x16x4xbf16>
    %11 = tpu.concatenate %2, %3, %4, %5, %6, %7, %8, %9, %10 in 2 : vector<16x16x4xbf16>, vector<16x16x4xbf16>, vector<16x16x4xbf16>, vector<16x16x4xbf16>, vector<16x16x4xbf16>, vector<16x16x4xbf16>, vector<16x16x4xbf16>, vector<16x16x4xbf16>, vector<16x16x4xbf16> -> vector<16x16x36xbf16>
    %cst = arith.constant 0.000000e+00 : bf16
    %12 = vector.broadcast %cst : bf16 to vector<16x16x36xbf16>
    %13 = arith.maximumf %11, %12 : vector<16x16x36xbf16>
    %14 = vector.shape_cast %13 : vector<16x16x36xbf16> to vector<256x36xbf16>
    %c0_3 = arith.constant 0 : index
    %c0_4 = arith.constant 0 : index
    %15 = vector.load %arg2[%c0_3, %c0_4] : memref<36x128xbf16, #tpu.memory_space<vmem>>, vector<36x128xbf16>
    %cst_5 = arith.constant dense<0.000000e+00> : vector<256x128xf32>
    %16 = tpu.matmul %14, %15, %cst_5 {dimension_numbers = #tpu.dot_dimension_numbers<[1], [0], [0], [1], [0, 0, 1, 1], [], []>} : vector<256x36xbf16>, vector<36x128xbf16>, vector<256x128xf32> -> vector<256x128xf32>
    %c0_6 = arith.constant 0 : index
    %c0_7 = arith.constant 0 : index
    %17 = vector.load %arg3[%c0_6, %c0_7] : memref<1x128xf32, #tpu.memory_space<vmem>>, vector<1x128xf32>
    %18 = vector.broadcast %17 : vector<1x128xf32> to vector<256x128xf32>
    %19 = arith.mulf %16, %18 : vector<256x128xf32>
    %c0_8 = arith.constant 0 : index
    %c0_9 = arith.constant 0 : index
    %20 = vector.load %arg4[%c0_8, %c0_9] : memref<1x128xf32, #tpu.memory_space<vmem>>, vector<1x128xf32>
    %21 = vector.broadcast %20 : vector<1x128xf32> to vector<256x128xf32>
    %22 = arith.addf %19, %21 : vector<256x128xf32>
    %23 = tpu.transpose %22, [1, 0] : vector<256x128xf32> -> vector<128x256xf32>
    %24 = vector.extract_strided_slice %23 {offsets = [0, 0], sizes = [8, 256], strides = [1, 1]} : vector<128x256xf32> to vector<8x256xf32>
    %c0_10 = arith.constant 0 : index
    %c0_11 = arith.constant 0 : index
    %c0_12 = arith.constant 0 : index
    %25 = vector.load %arg5[%c0_10, %c0_11, %c0_12] : memref<1x8x256xf32, #tpu.memory_space<vmem>>, vector<1x8x256xf32>
    %26 = vector.shape_cast %25 : vector<1x8x256xf32> to vector<8x256xf32>
    %27 = vector.shape_cast %24 : vector<8x256xf32> to vector<1x8x256xf32>
    tpu.vector_store %arg5[%c0_10, %c0_11, %c0_12], %27 {strides = array<i32>} : memref<1x8x256xf32, #tpu.memory_space<vmem>>, vector<1x8x256xf32>,
    return
  }
  func.func @transform_0(%arg0: i32) -> (i32, i32, i32, i32) {
    %c0_i32 = arith.constant 0 : i32
    %c0_i32_0 = arith.constant 0 : i32
    %c0_i32_1 = arith.constant 0 : i32
    %c0_i32_2 = arith.constant 0 : i32
    return %arg0, %c0_i32, %c0_i32_0, %c0_i32_1 : i32, i32, i32, i32
  }
  func.func @transform_1(%arg0: i32) -> (i32, i32) {
    %c0_i32 = arith.constant 0 : i32
    %c0_i32_0 = arith.constant 0 : i32
    %c0_i32_1 = arith.constant 0 : i32
    return %c0_i32, %c0_i32_0 : i32, i32
  }
  func.func @transform_2(%arg0: i32) -> (i32, i32) {
    %c0_i32 = arith.constant 0 : i32
    %c0_i32_0 = arith.constant 0 : i32
    %c0_i32_1 = arith.constant 0 : i32
    return %c0_i32, %c0_i32_0 : i32, i32
  }
  func.func @transform_3(%arg0: i32) -> (i32, i32) {
    %c0_i32 = arith.constant 0 : i32
    %c0_i32_0 = arith.constant 0 : i32
    %c0_i32_1 = arith.constant 0 : i32
    return %c0_i32, %c0_i32_0 : i32, i32
  }
  func.func @transform_4(%arg0: i32) -> (i32, i32, i32) {
    %c0_i32 = arith.constant 0 : i32
    %c0_i32_0 = arith.constant 0 : i32
    %c0_i32_1 = arith.constant 0 : i32
    return %arg0, %c0_i32, %c0_i32_0 : i32, i32, i32
  }
}

</mosaic_0001>

<llo_original>
// kernel: relu_conv_bn.2
$region0: #{relu_conv_bn.2}
  #allocation0 [shape = 'u32[]', space=smem, size = 0x4, offset = 0x4, fixed_abs, tag = 'smem constant byte address 0x4 - core index']
  #allocation1 [shape = 'u32[72,128]{1,0:T(1,128)}', space=vmem, size = 0x9000, scoped, tag = 'internal scratch']
  %s0 = inlined_call_operand.vmem [shape: bf16[2,18,18,4], index: 0, kind: input, shape index: {}]
  %s1 = inlined_call_operand.vmem [shape: bf16[36,128], index: 1, kind: input, shape index: {}]
  %s2 = inlined_call_operand.vmem [shape: f32[2,1,128], index: 2, kind: output, shape index: {0}]
  %s3 = inlined_call_operand.vmem [shape: f32[2,1,128], index: 3, kind: output, shape index: {1}]
  %4 = xla_tuple %s2, %s3
  %s5 = sld [smem:[#allocation0]]
  $region49: #{relu_conv_bn.2} parent=0
    _
  %s7 = ssub.s32 1, %s5
  %s8 = scalar_select 0, %s7, %s5
  loop: start=0, step=1, limit=4
  $region2: #{relu_conv_bn.2} parent=0 // loop_pre_header
    _
  $region3: #{relu_conv_bn.2} parent=0 // loop_header
    %s10 = sphi 0, %s14
    %p11 = scmp.ge.s32.totalorder %s10, 4
    %s20 = sphi 0, %s22
    %s23 = sphi 0, %s20
    %s24 = sphi 0, %s23
    %s40 = sphi 0, %s24
    %s44 = sphi 0, %s44
    %s46 = sphi 0, %s44
    %s47 = sphi 0, %s46
    %s61 = sphi 0, %s47
    %s67 = sphi 0, %s69
    %s70 = sphi 0, %s67
    %s71 = sphi 0, %s70
    %s87 = sphi 0, %s71
    %s93 = sphi 0, %s95
    %s96 = sphi 0, %s93
    %s97 = sphi 0, %s96
    %s113 = sphi 0, %s97
  $region4: #{relu_conv_bn.2} parent=0 // loop_header_branch
    %13 = sbr.rel (%p11) target = $region8
  $region5: #{relu_conv_bn.2} parent=0 // loop_body
    %s15 = ssub.s32 %s10, 1
    %s16 = ssub.s32 %s10, 2
    %s17 = sadd.s32 %s10, 1
    %s18 = ssub.s32 %s10, %s17
    %p19 = scmp.eq.s32.totalorder %s18, 0
    %s21 = sadd.s32 %s20, 1
    %s22 = scalar_select %p19, %s20, %s21
    %p25 = pneg %p19
    %p26 = scmp.eq.s32.totalorder %s10, 1
    %p27 = por %p25, %p26
    %p28 = scmp.ne.s32.totalorder %s20, %s23
    %p29 = scmp.eq.s32.totalorder %s10, 0
    %p30 = por %p28, %p29
    %p31 = scmp.ne.s32.totalorder %s20, %s23
    %p32 = scmp.eq.s32.totalorder %s15, 1
    %p33 = por %p31, %p32
    %p34 = scmp.ne.s32.totalorder %s23, %s24
    %p35 = scmp.eq.s32.totalorder %s15, 0
    %p36 = por %p34, %p35
    %p37 = scmp.ne.s32.totalorder %s23, %s24
    %p38 = scmp.eq.s32.totalorder %s16, 1
    %p39 = por %p37, %p38
    %p41 = scmp.ne.s32.totalorder %s24, %s40
    %p42 = scmp.eq.s32.totalorder %s16, 0
    %p43 = por %p41, %p42
    %s45 = sadd.s32 %s44, 1
    %p48 = scmp.eq.s32.totalorder %s10, 1
    %p49 = scmp.ne.s32.totalorder %s44, %s46
    %p50 = scmp.eq.s32.totalorder %s10, 0
    %p51 = por %p49, %p50
    %p52 = scmp.ne.s32.totalorder %s44, %s46
    %p53 = scmp.eq.s32.totalorder %s15, 1
    %p54 = por %p52, %p53
    %p55 = scmp.ne.s32.totalorder %s46, %s47
    %p56 = scmp.eq.s32.totalorder %s15, 0
    %p57 = por %p55, %p56
    %p58 = scmp.ne.s32.totalorder %s46, %s47
    %p59 = scmp.eq.s32.totalorder %s16, 1
    %p60 = por %p58, %p59
    %p62 = scmp.ne.s32.totalorder %s47, %s61
    %p63 = scmp.eq.s32.totalorder %s16, 0
    %p64 = por %p62, %p63
    %s65 = ssub.s32 %s10, %s17
    %p66 = scmp.eq.s32.totalorder %s65, 0
    %s68 = sadd.s32 %s67, 1
    %s69 = scalar_select %p66, %s67, %s68
    %p72 = pneg %p66
    %p73 = scmp.eq.s32.totalorder %s10, 1
    %p74 = por %p72, %p73
    %p75 = scmp.ne.s32.totalorder %s67, %s70
    %p76 = scmp.eq.s32.totalorder %s10, 0
    %p77 = por %p75, %p76
    %p78 = scmp.ne.s32.totalorder %s67, %s70
    %p79 = scmp.eq.s32.totalorder %s15, 1
    %p80 = por %p78, %p79
    %p81 = scmp.ne.s32.totalorder %s70, %s71
    %p82 = scmp.eq.s32.totalorder %s15, 0
    %p83 = por %p81, %p82
    %p84 = scmp.ne.s32.totalorder %s70, %s71
    %p85 = scmp.eq.s32.totalorder %s16, 1
    %p86 = por %p84, %p85
    %p88 = scmp.ne.s32.totalorder %s71, %s87
    %p89 = scmp.eq.s32.totalorder %s16, 0
    %p90 = por %p88, %p89
    %s91 = ssub.s32 %s10, %s17
    %p92 = scmp.eq.s32.totalorder %s91, 0
    %s94 = sadd.s32 %s93, 1
    %s95 = scalar_select %p92, %s93, %s94
    %p98 = pneg %p92
    %p99 = scmp.eq.s32.totalorder %s10, 1
    %p100 = por %p98, %p99
    %p101 = scmp.ne.s32.totalorder %s93, %s96
    %p102 = scmp.eq.s32.totalorder %s10, 0
    %p103 = por %p101, %p102
    %p104 = scmp.ne.s32.totalorder %s93, %s96
    %p105 = scmp.eq.s32.totalorder %s15, 1
    %p106 = por %p104, %p105
    %p107 = scmp.ne.s32.totalorder %s96, %s97
    %p108 = scmp.eq.s32.totalorder %s15, 0
    %p109 = por %p107, %p108
    %p110 = scmp.ne.s32.totalorder %s96, %s97
    %p111 = scmp.eq.s32.totalorder %s16, 1
    %p112 = por %p110, %p111
    %p114 = scmp.ne.s32.totalorder %s97, %s113
    %p115 = scmp.eq.s32.totalorder %s16, 0
    %p116 = por %p114, %p115
    %p117 = scmp.le.s32.totalorder 1, %s10
    %p118 = scmp.lt.s32.totalorder %s10, 3
    %p119 = pnand %p117, %p118
    %p120 = pneg %p119
    // Predicated region
    $region9: #{relu_conv_bn.2} parent=5 // pred_check
      _
    $region10: #{relu_conv_bn.2} parent=5 // pred_check_branch
      %122 = sbr.rel (%p119) target = $region12
    $region11: #{relu_conv_bn.2} parent=5 // pred_region
      %s123 = ssub.s32 %s10, 1
      // Predicated region
      $region13: #{relu_conv_bn.2} parent=11 // pred_check
        %p124 = pneg %p57
      $region14: #{relu_conv_bn.2} parent=11 // pred_check_branch
        %126 = sbr.rel (%p124) target = $region16
      $region15: #{relu_conv_bn.2} parent=11 // pred_region
        _
      $region16: #{relu_conv_bn.2} parent=11 // pred_fallthru
        _
    $region12: #{relu_conv_bn.2} parent=5 // pred_fallthru
      _
    %p127 = scmp.lt.s32.totalorder %s10, 2
    // Predicated region
    $region17: #{relu_conv_bn.2} parent=5 // pred_check
      %p128 = pneg %p127
    $region18: #{relu_conv_bn.2} parent=5 // pred_check_branch
      %130 = sbr.rel (%p128) target = $region20
    $region19: #{relu_conv_bn.2} parent=5 // pred_region
      // Predicated region
      $region21: #{relu_conv_bn.2} parent=19 // pred_check
        %p131 = pneg %p30
      $region22: #{relu_conv_bn.2} parent=19 // pred_check_branch
        %133 = sbr.rel (%p131) target = $region24
      $region23: #{relu_conv_bn.2} parent=19 // pred_region
        %p134 = scmp.lt.s32.totalorder %s10, 1
        %s135 = scalar_select %p134, %s10, 1
        %s136 = smul.addr %s135, 54
        %s137 = smul.addr %s136, 4
        %s138 = scalar_lea.vmem %s0, %s137
      $region24: #{relu_conv_bn.2} parent=19 // pred_fallthru
        _
    $region20: #{relu_conv_bn.2} parent=5 // pred_fallthru
      _
    %p139 = scmp.le.s32.totalorder 1, %s10
    %p140 = scmp.lt.s32.totalorder %s10, 3
    %p141 = pnand %p139, %p140
    %p142 = pneg %p141
    // Predicated region
    $region25: #{relu_conv_bn.2} parent=5 // pred_check
      _
    $region26: #{relu_conv_bn.2} parent=5 // pred_check_branch
      %144 = sbr.rel (%p141) target = $region28
    $region27: #{relu_conv_bn.2} parent=5 // pred_region
      %s145 = ssub.s32 %s10, 1
      %p146 = scmp.lt.s32.totalorder %s15, 1
      %s147 = scalar_select %p146, %s15, 1
      %s148 = smul.addr %s147, 54
      %s149 = smul.addr %s148, 4
      %s150 = scalar_lea.vmem %s0, %s149
      %p151 = pneg %p36
      %p152 = pneg %p33
      %p153 = pneg %p57
      %p154 = pneg %p54
      %p155 = pneg %p83
      %p156 = pneg %p80
      %p157 = scmp.lt.s32.totalorder %s15, 1
      %s158 = scalar_select %p157, %s15, 1
      %s159 = scalar_lea.vmem %s2, %s158
      %p160 = pneg %p109
      %p161 = pneg %p106
      %p162 = scmp.lt.s32.totalorder %s15, 1
      %s163 = scalar_select %p162, %s15, 1
      %s164 = scalar_lea.vmem %s3, %s163
      %p165 = scmp.lt.s32.totalorder %s15, 1
      %s166 = scalar_select %p165, %s15, 1
      %s167 = smul.addr %s166, 54
      %s168 = smul.addr %s167, 4
      %s169 = scalar_lea.vmem %s0, %s168
      %p170 = scmp.lt.s32.totalorder %s15, 1
      %s171 = scalar_select %p170, %s15, 1
      %s172 = scalar_lea.vmem %s2, %s171
      %p173 = scmp.lt.s32.totalorder %s15, 1
      %s174 = scalar_select %p173, %s15, 1
      %s175 = scalar_lea.vmem %s3, %s174
      %v177 = vld [vmem:[%s169] sm:$0xf]
      %v178 = vld [vmem:[%s169 + $0x4] sm:$0xf]
      %v179 = vld [vmem:[%s169 + $0x8] sm:$0x1]
      %v180 = vld [vmem:[%s169 + $0xc] sm:$0xf]
      %v181 = vld [vmem:[%s169 + $0x10] sm:$0xf]
      %v182 = vld [vmem:[%s169 + $0x14] sm:$0x1]
      %v183 = vld [vmem:[%s169 + $0x18] sm:$0xf]
      %v184 = vld [vmem:[%s169 + $0x1c] sm:$0xf]
      %v185 = vld [vmem:[%s169 + $0x20] sm:$0x1]
      %v186 = vld [vmem:[%s169 + $0x24] sm:$0xf]
      %v187 = vld [vmem:[%s169 + $0x28] sm:$0xf]
      %v188 = vld [vmem:[%s169 + $0x2c] sm:$0x1]
      %v189 = vld [vmem:[%s169 + $0x30] sm:$0xf]
      %v190 = vld [vmem:[%s169 + $0x34] sm:$0xf]
      %v191 = vld [vmem:[%s169 + $0x38] sm:$0x1]
      %v192 = vld [vmem:[%s169 + $0x3c] sm:$0xf]
      %v193 = vld [vmem:[%s169 + $0x40] sm:$0xf]
      %v194 = vld [vmem:[%s169 + $0x44] sm:$0x1]
      %v195 = vld [vmem:[%s169 + $0x48] sm:$0xf]
      %v196 = vld [vmem:[%s169 + $0x4c] sm:$0xf]
      %v197 = vld [vmem:[%s169 + $0x50] sm:$0x1]
      %v198 = vld [vmem:[%s169 + $0x54] sm:$0xf]
      %v199 = vld [vmem:[%s169 + $0x58] sm:$0xf]
      %v200 = vld [vmem:[%s169 + $0x5c] sm:$0x1]
      %v201 = vld [vmem:[%s169 + $0x60] sm:$0xf]
      %v202 = vld [vmem:[%s169 + $0x64] sm:$0xf]
      %v203 = vld [vmem:[%s169 + $0x68] sm:$0x1]
      %v204 = vld [vmem:[%s169 + $0x6c] sm:$0xf]
      %v205 = vld [vmem:[%s169 + $0x70] sm:$0xf]
      %v206 = vld [vmem:[%s169 + $0x74] sm:$0x1]
      %v207 = vld [vmem:[%s169 + $0x78] sm:$0xf]
      %v208 = vld [vmem:[%s169 + $0x7c] sm:$0xf]
      %v209 = vld [vmem:[%s169 + $0x80] sm:$0x1]
      %v210 = vld [vmem:[%s169 + $0x84] sm:$0xf]
      %v211 = vld [vmem:[%s169 + $0x88] sm:$0xf]
      %v212 = vld [vmem:[%s169 + $0x8c] sm:$0x1]
      %v213 = vld [vmem:[%s169 + $0x90] sm:$0xf]
      %v214 = vld [vmem:[%s169 + $0x94] sm:$0xf]
      %v215 = vld [vmem:[%s169 + $0x98] sm:$0x1]
      %v216 = vld [vmem:[%s169 + $0x9c] sm:$0xf]
      %v217 = vld [vmem:[%s169 + $0xa0] sm:$0xf]
      %v218 = vld [vmem:[%s169 + $0xa4] sm:$0x1]
      %v219 = vld [vmem:[%s169 + $0xa8] sm:$0xf]
      %v220 = vld [vmem:[%s169 + $0xac] sm:$0xf]
      %v221 = vld [vmem:[%s169 + $0xb0] sm:$0x1]
      %v222 = vld [vmem:[%s169 + $0xb4] sm:$0xf]
      %v223 = vld [vmem:[%s169 + $0xb8] sm:$0xf]
      %v224 = vld [vmem:[%s169 + $0xbc] sm:$0x1]
      %v225 = vld [vmem:[%s169 + $0xc0] sm:$0xf]
      %v226 = vld [vmem:[%s169 + $0xc4] sm:$0xf]
      %v227 = vld [vmem:[%s169 + $0xc8] sm:$0x1]
      %v228 = vld [vmem:[%s169 + $0xcc] sm:$0xf]
      %v229 = vld [vmem:[%s169 + $0xd0] sm:$0xf]
      %v230 = vld [vmem:[%s169 + $0xd4] sm:$0x1]
      %v263 = vunpack.c.l.b16 %v177
      %v264 = vunpack.c.l.b16 %v178
      %v265 = vunpack.c.l.b16 %v180
      %v266 = vunpack.c.l.b16 %v181
      %v267 = vunpack.c.l.b16 %v183
      %v268 = vunpack.c.l.b16 %v184
      %v269 = vunpack.c.l.b16 %v186
      %v270 = vunpack.c.l.b16 %v187
      %v271 = vunpack.c.l.b16 %v189
      %v272 = vunpack.c.l.b16 %v190
      %v273 = vunpack.c.l.b16 %v192
      %v274 = vunpack.c.l.b16 %v193
      %v275 = vunpack.c.l.b16 %v195
      %v276 = vunpack.c.l.b16 %v196
      %v277 = vunpack.c.l.b16 %v198
      %v278 = vunpack.c.l.b16 %v199
      %v279 = vunpack.c.l.b16 %v201
      %v280 = vunpack.c.l.b16 %v202
      %v281 = vunpack.c.l.b16 %v204
      %v282 = vunpack.c.l.b16 %v205
      %v283 = vunpack.c.l.b16 %v207
      %v284 = vunpack.c.l.b16 %v208
      %v285 = vunpack.c.l.b16 %v210
      %v286 = vunpack.c.l.b16 %v211
      %v287 = vunpack.c.l.b16 %v213
      %v288 = vunpack.c.l.b16 %v214
      %v289 = vunpack.c.l.b16 %v216
      %v290 = vunpack.c.l.b16 %v217
      %v291 = vunpack.c.l.b16 %v219
      %v292 = vunpack.c.l.b16 %v220
      %v293 = vunpack.c.l.b16 %v222
      %v294 = vunpack.c.l.b16 %v223
      %v295 = vpack.c.b16 %v264, %v263
      %v296 = vpack.c.b16 %v266, %v265
      %v297 = vpack.c.b16 %v268, %v267
      %v298 = vpack.c.b16 %v270, %v269
      %v299 = vpack.c.b16 %v272, %v271
      %v300 = vpack.c.b16 %v274, %v273
      %v301 = vpack.c.b16 %v276, %v275
      %v302 = vpack.c.b16 %v278, %v277
      %v303 = vpack.c.b16 %v280, %v279
      %v304 = vpack.c.b16 %v282, %v281
      %v305 = vpack.c.b16 %v284, %v283
      %v306 = vpack.c.b16 %v286, %v285
      %v307 = vpack.c.b16 %v288, %v287
      %v308 = vpack.c.b16 %v290, %v289
      %v309 = vpack.c.b16 %v292, %v291
      %v310 = vpack.c.b16 %v294, %v293
      %v327 = vunpack.c.l.b16 %v179
      %v328 = vunpack.c.l.b16 %v182
      %v329 = vunpack.c.l.b16 %v185
      %v330 = vunpack.c.l.b16 %v188
      %v331 = vunpack.c.l.b16 %v191
      %v332 = vunpack.c.l.b16 %v194
      %v333 = vunpack.c.l.b16 %v197
      %v334 = vunpack.c.l.b16 %v200
      %v335 = vunpack.c.l.b16 %v203
      %v336 = vunpack.c.l.b16 %v206
      %v337 = vunpack.c.l.b16 %v209
      %v338 = vunpack.c.l.b16 %v212
      %v339 = vunpack.c.l.b16 %v215
      %v340 = vunpack.c.l.b16 %v218
      %v341 = vunpack.c.l.b16 %v221
      %v342 = vunpack.c.l.b16 %v224
      %v343 = vpack.c.b16 %v327, %v327
      %v344 = vpack.c.b16 %v328, %v328
      %v345 = vpack.c.b16 %v329, %v329
      %v346 = vpack.c.b16 %v330, %v330
      %v347 = vpack.c.b16 %v331, %v331
      %v348 = vpack.c.b16 %v332, %v332
      %v349 = vpack.c.b16 %v333, %v333
      %v350 = vpack.c.b16 %v334, %v334
      %v351 = vpack.c.b16 %v335, %v335
      %v352 = vpack.c.b16 %v336, %v336
      %v353 = vpack.c.b16 %v337, %v337
      %v354 = vpack.c.b16 %v338, %v338
      %v355 = vpack.c.b16 %v339, %v339
      %v356 = vpack.c.b16 %v340, %v340
      %v357 = vpack.c.b16 %v341, %v341
      %v358 = vpack.c.b16 %v342, %v342
      %vm359 = vsmask.f32 7424
      %v361 = vshrl.u32 %v295, 16
      %v363 = vshll.u32 %v295, 16
      %v365 = vrot.slane %v363, 1
      %v366 = vor.u32 %v361, %v365
      %v368 = vshll.u32 %v343, 16
      %v370 = vrot.slane %v368, 1
      %v371 = vsel %vm359, %v366, %v370
      %v373 = vshrl.u32 %v296, 16
      %v375 = vshll.u32 %v296, 16
      %v377 = vrot.slane %v375, 1
      %v378 = vor.u32 %v373, %v377
      %v380 = vshll.u32 %v344, 16
      %v382 = vrot.slane %v380, 1
      %v383 = vsel %vm359, %v378, %v382
      %v385 = vshrl.u32 %v297, 16
      %v387 = vshll.u32 %v297, 16
      %v389 = vrot.slane %v387, 1
      %v390 = vor.u32 %v385, %v389
      %v392 = vshll.u32 %v345, 16
      %v394 = vrot.slane %v392, 1
      %v395 = vsel %vm359, %v390, %v394
      %v397 = vshrl.u32 %v298, 16
      %v399 = vshll.u32 %v298, 16
      %v401 = vrot.slane %v399, 1
      %v402 = vor.u32 %v397, %v401
      %v404 = vshll.u32 %v346, 16
      %v406 = vrot.slane %v404, 1
      %v407 = vsel %vm359, %v402, %v406
      %v409 = vshrl.u32 %v299, 16
      %v411 = vshll.u32 %v299, 16
      %v413 = vrot.slane %v411, 1
      %v414 = vor.u32 %v409, %v413
      %v416 = vshll.u32 %v347, 16
      %v418 = vrot.slane %v416, 1
      %v419 = vsel %vm359, %v414, %v418
      %v421 = vshrl.u32 %v300, 16
      %v423 = vshll.u32 %v300, 16
      %v425 = vrot.slane %v423, 1
      %v426 = vor.u32 %v421, %v425
      %v428 = vshll.u32 %v348, 16
      %v430 = vrot.slane %v428, 1
      %v431 = vsel %vm359, %v426, %v430
      %v433 = vshrl.u32 %v301, 16
      %v435 = vshll.u32 %v301, 16
      %v437 = vrot.slane %v435, 1
      %v438 = vor.u32 %v433, %v437
      %v440 = vshll.u32 %v349, 16
      %v442 = vrot.slane %v440, 1
      %v443 = vsel %vm359, %v438, %v442
      %v445 = vshrl.u32 %v302, 16
      %v447 = vshll.u32 %v302, 16
      %v449 = vrot.slane %v447, 1
      %v450 = vor.u32 %v445, %v449
      %v452 = vshll.u32 %v350, 16
      %v454 = vrot.slane %v452, 1
      %v455 = vsel %vm359, %v450, %v454
      %v457 = vshrl.u32 %v303, 16
      %v459 = vshll.u32 %v303, 16
      %v461 = vrot.slane %v459, 1
      %v462 = vor.u32 %v457, %v461
      %v464 = vshll.u32 %v351, 16
      %v466 = vrot.slane %v464, 1
      %v467 = vsel %vm359, %v462, %v466
      %v469 = vshrl.u32 %v304, 16
      %v471 = vshll.u32 %v304, 16
      %v473 = vrot.slane %v471, 1
      %v474 = vor.u32 %v469, %v473
      %v476 = vshll.u32 %v352, 16
      %v478 = vrot.slane %v476, 1
      %v479 = vsel %vm359, %v474, %v478
      %v481 = vshrl.u32 %v305, 16
      %v483 = vshll.u32 %v305, 16
      %v485 = vrot.slane %v483, 1
      %v486 = vor.u32 %v481, %v485
      %v488 = vshll.u32 %v353, 16
      %v490 = vrot.slane %v488, 1
      %v491 = vsel %vm359, %v486, %v490
      %v493 = vshrl.u32 %v306, 16
      %v495 = vshll.u32 %v306, 16
      %v497 = vrot.slane %v495, 1
      %v498 = vor.u32 %v493, %v497
      %v500 = vshll.u32 %v354, 16
      %v502 = vrot.slane %v500, 1
      %v503 = vsel %vm359, %v498, %v502
      %v505 = vshrl.u32 %v307, 16
      %v507 = vshll.u32 %v307, 16
      %v509 = vrot.slane %v507, 1
      %v510 = vor.u32 %v505, %v509
      %v512 = vshll.u32 %v355, 16
      %v514 = vrot.slane %v512, 1
      %v515 = vsel %vm359, %v510, %v514
      %v517 = vshrl.u32 %v308, 16
      %v519 = vshll.u32 %v308, 16
      %v521 = vrot.slane %v519, 1
      %v522 = vor.u32 %v517, %v521
      %v524 = vshll.u32 %v356, 16
      %v526 = vrot.slane %v524, 1
      %v527 = vsel %vm359, %v522, %v526
      %v529 = vshrl.u32 %v309, 16
      %v531 = vshll.u32 %v309, 16
      %v533 = vrot.slane %v531, 1
      %v534 = vor.u32 %v529, %v533
      %v536 = vshll.u32 %v357, 16
      %v538 = vrot.slane %v536, 1
      %v539 = vsel %vm359, %v534, %v538
      %v541 = vshrl.u32 %v310, 16
      %v543 = vshll.u32 %v310, 16
      %v545 = vrot.slane %v543, 1
      %v546 = vor.u32 %v541, %v545
      %v548 = vshll.u32 %v358, 16
      %v550 = vrot.slane %v548, 1
      %v551 = vsel %vm359, %v546, %v550
      %552 = vrot.lane.b32.xlu0 %v371, 4
      %v553 = vpop.permute.xlu0 %552
      %554 = vrot.lane.b32.xlu0 %v383, 4
      %v555 = vpop.permute.xlu0 %554
      %556 = vrot.lane.b32.xlu0 %v395, 4
      %v557 = vpop.permute.xlu0 %556
      %558 = vrot.lane.b32.xlu0 %v407, 4
      %v559 = vpop.permute.xlu0 %558
      %560 = vrot.lane.b32.xlu0 %v419, 4
      %v561 = vpop.permute.xlu0 %560
      %562 = vrot.lane.b32.xlu0 %v431, 4
      %v563 = vpop.permute.xlu0 %562
      %564 = vrot.lane.b32.xlu0 %v443, 4
      %v565 = vpop.permute.xlu0 %564
      %566 = vrot.lane.b32.xlu0 %v455, 4
      %v567 = vpop.permute.xlu0 %566
      %568 = vrot.lane.b32.xlu0 %v467, 4
      %v569 = vpop.permute.xlu0 %568
      %570 = vrot.lane.b32.xlu0 %v479, 4
      %v571 = vpop.permute.xlu0 %570
      %572 = vrot.lane.b32.xlu0 %v491, 4
      %v573 = vpop.permute.xlu0 %572
      %574 = vrot.lane.b32.xlu0 %v503, 4
      %v575 = vpop.permute.xlu0 %574
      %576 = vrot.lane.b32.xlu0 %v515, 4
      %v577 = vpop.permute.xlu0 %576
      %578 = vrot.lane.b32.xlu0 %v527, 4
      %v579 = vpop.permute.xlu0 %578
      %580 = vrot.lane.b32.xlu0 %v539, 4
      %v581 = vpop.permute.xlu0 %580
      %582 = vrot.lane.b32.xlu0 %v551, 4
      %v583 = vpop.permute.xlu0 %582
      %vm584 = vcmask 1046528
      %v585 = vrot.slane %v295, 1
      %v586 = vrot.slane %v343, 1
      %v587 = vsel %vm584, %v585, %v586
      %v588 = vrot.slane %v296, 1
      %v589 = vrot.slane %v344, 1
      %v590 = vsel %vm584, %v588, %v589
      %v591 = vrot.slane %v297, 1
      %v592 = vrot.slane %v345, 1
      %v593 = vsel %vm584, %v591, %v592
      %v594 = vrot.slane %v298, 1
      %v595 = vrot.slane %v346, 1
      %v596 = vsel %vm584, %v594, %v595
      %v597 = vrot.slane %v299, 1
      %v598 = vrot.slane %v347, 1
      %v599 = vsel %vm584, %v597, %v598
      %v600 = vrot.slane %v300, 1
      %v601 = vrot.slane %v348, 1
      %v602 = vsel %vm584, %v600, %v601
      %v603 = vrot.slane %v301, 1
      %v604 = vrot.slane %v349, 1
      %v605 = vsel %vm584, %v603, %v604
      %v606 = vrot.slane %v302, 1
      %v607 = vrot.slane %v350, 1
      %v608 = vsel %vm584, %v606, %v607
      %v609 = vrot.slane %v303, 1
      %v610 = vrot.slane %v351, 1
      %v611 = vsel %vm584, %v609, %v610
      %v612 = vrot.slane %v304, 1
      %v613 = vrot.slane %v352, 1
      %v614 = vsel %vm584, %v612, %v613
      %v615 = vrot.slane %v305, 1
      %v616 = vrot.slane %v353, 1
      %v617 = vsel %vm584, %v615, %v616
      %v618 = vrot.slane %v306, 1
      %v619 = vrot.slane %v354, 1
      %v620 = vsel %vm584, %v618, %v619
      %v621 = vrot.slane %v307, 1
      %v622 = vrot.slane %v355, 1
      %v623 = vsel %vm584, %v621, %v622
      %v624 = vrot.slane %v308, 1
      %v625 = vrot.slane %v356, 1
      %v626 = vsel %vm584, %v624, %v625
      %v627 = vrot.slane %v309, 1
      %v628 = vrot.slane %v357, 1
      %v629 = vsel %vm584, %v627, %v628
      %v630 = vrot.slane %v310, 1
      %v631 = vrot.slane %v358, 1
      %v632 = vsel %vm584, %v630, %v631
      %633 = vrot.lane.b32.xlu0 %v587, 8
      %v634 = vpop.permute.xlu0 %633
      %635 = vrot.lane.b32.xlu0 %v590, 8
      %v636 = vpop.permute.xlu0 %635
      %637 = vrot.lane.b32.xlu0 %v593, 8
      %v638 = vpop.permute.xlu0 %637
      %639 = vrot.lane.b32.xlu0 %v596, 8
      %v640 = vpop.permute.xlu0 %639
      %641 = vrot.lane.b32.xlu0 %v599, 8
      %v642 = vpop.permute.xlu0 %641
      %643 = vrot.lane.b32.xlu0 %v602, 8
      %v644 = vpop.permute.xlu0 %643
      %645 = vrot.lane.b32.xlu0 %v605, 8
      %v646 = vpop.permute.xlu0 %645
      %647 = vrot.lane.b32.xlu0 %v608, 8
      %v648 = vpop.permute.xlu0 %647
      %649 = vrot.lane.b32.xlu0 %v611, 8
      %v650 = vpop.permute.xlu0 %649
      %651 = vrot.lane.b32.xlu0 %v614, 8
      %v652 = vpop.permute.xlu0 %651
      %653 = vrot.lane.b32.xlu0 %v617, 8
      %v654 = vpop.permute.xlu0 %653
      %655 = vrot.lane.b32.xlu0 %v620, 8
      %v656 = vpop.permute.xlu0 %655
      %657 = vrot.lane.b32.xlu0 %v623, 8
      %v658 = vpop.permute.xlu0 %657
      %659 = vrot.lane.b32.xlu0 %v626, 8
      %v660 = vpop.permute.xlu0 %659
      %661 = vrot.lane.b32.xlu0 %v629, 8
      %v662 = vpop.permute.xlu0 %661
      %663 = vrot.lane.b32.xlu0 %v632, 8
      %v664 = vpop.permute.xlu0 %663
      %v667 = vunpack.c.l.b16 %v225
      %v668 = vunpack.c.l.b16 %v226
      %v669 = vpack.c.b16 %v668, %v667
      %670 = vrot.lane.b32.xlu0 %v296, 12
      %v671 = vpop.permute.xlu0 %670
      %672 = vrot.lane.b32.xlu0 %v297, 12
      %v673 = vpop.permute.xlu0 %672
      %674 = vrot.lane.b32.xlu0 %v298, 12
      %v675 = vpop.permute.xlu0 %674
      %676 = vrot.lane.b32.xlu0 %v299, 12
      %v677 = vpop.permute.xlu0 %676
      %678 = vrot.lane.b32.xlu0 %v300, 12
      %v679 = vpop.permute.xlu0 %678
      %680 = vrot.lane.b32.xlu0 %v301, 12
      %v681 = vpop.permute.xlu0 %680
      %682 = vrot.lane.b32.xlu0 %v302, 12
      %v683 = vpop.permute.xlu0 %682
      %684 = vrot.lane.b32.xlu0 %v303, 12
      %v685 = vpop.permute.xlu0 %684
      %686 = vrot.lane.b32.xlu0 %v304, 12
      %v687 = vpop.permute.xlu0 %686
      %688 = vrot.lane.b32.xlu0 %v305, 12
      %v689 = vpop.permute.xlu0 %688
      %690 = vrot.lane.b32.xlu0 %v306, 12
      %v691 = vpop.permute.xlu0 %690
      %692 = vrot.lane.b32.xlu0 %v307, 12
      %v693 = vpop.permute.xlu0 %692
      %694 = vrot.lane.b32.xlu0 %v308, 12
      %v695 = vpop.permute.xlu0 %694
      %696 = vrot.lane.b32.xlu0 %v309, 12
      %v697 = vpop.permute.xlu0 %696
      %698 = vrot.lane.b32.xlu0 %v310, 12
      %v699 = vpop.permute.xlu0 %698
      %700 = vrot.lane.b32.xlu0 %v669, 12
      %v701 = vpop.permute.xlu0 %700
      %v703 = vunpack.c.l.b16 %v227
      %v704 = vpack.c.b16 %v703, %v703
      %v706 = vshrl.u32 %v669, 16
      %v708 = vshll.u32 %v669, 16
      %v710 = vrot.slane %v708, 1
      %v711 = vor.u32 %v706, %v710
      %v713 = vshll.u32 %v704, 16
      %v715 = vrot.slane %v713, 1
      %v716 = vsel %vm359, %v711, %v715
      %717 = vrot.lane.b32.xlu0 %v383, 16
      %v718 = vpop.permute.xlu0 %717
      %719 = vrot.lane.b32.xlu0 %v395, 16
      %v720 = vpop.permute.xlu0 %719
      %721 = vrot.lane.b32.xlu0 %v407, 16
      %v722 = vpop.permute.xlu0 %721
      %723 = vrot.lane.b32.xlu0 %v419, 16
      %v724 = vpop.permute.xlu0 %723
      %725 = vrot.lane.b32.xlu0 %v431, 16
      %v726 = vpop.permute.xlu0 %725
      %727 = vrot.lane.b32.xlu0 %v443, 16
      %v728 = vpop.permute.xlu0 %727
      %729 = vrot.lane.b32.xlu0 %v455, 16
      %v730 = vpop.permute.xlu0 %729
      %731 = vrot.lane.b32.xlu0 %v467, 16
      %v732 = vpop.permute.xlu0 %731
      %733 = vrot.lane.b32.xlu0 %v479, 16
      %v734 = vpop.permute.xlu0 %733
      %735 = vrot.lane.b32.xlu0 %v491, 16
      %v736 = vpop.permute.xlu0 %735
      %737 = vrot.lane.b32.xlu0 %v503, 16
      %v738 = vpop.permute.xlu0 %737
      %739 = vrot.lane.b32.xlu0 %v515, 16
      %v740 = vpop.permute.xlu0 %739
      %741 = vrot.lane.b32.xlu0 %v527, 16
      %v742 = vpop.permute.xlu0 %741
      %743 = vrot.lane.b32.xlu0 %v539, 16
      %v744 = vpop.permute.xlu0 %743
      %745 = vrot.lane.b32.xlu0 %v551, 16
      %v746 = vpop.permute.xlu0 %745
      %747 = vrot.lane.b32.xlu0 %v716, 16
      %v748 = vpop.permute.xlu0 %747
      %v749 = vrot.slane %v669, 1
      %v750 = vrot.slane %v704, 1
      %v751 = vsel %vm584, %v749, %v750
      %752 = vrot.lane.b32.xlu0 %v590, 20
      %v753 = vpop.permute.xlu0 %752
      %754 = vrot.lane.b32.xlu0 %v593, 20
      %v755 = vpop.permute.xlu0 %754
      %756 = vrot.lane.b32.xlu0 %v596, 20
      %v757 = vpop.permute.xlu0 %756
      %758 = vrot.lane.b32.xlu0 %v599, 20
      %v759 = vpop.permute.xlu0 %758
      %760 = vrot.lane.b32.xlu0 %v602, 20
      %v761 = vpop.permute.xlu0 %760
      %762 = vrot.lane.b32.xlu0 %v605, 20
      %v763 = vpop.permute.xlu0 %762
      %764 = vrot.lane.b32.xlu0 %v608, 20
      %v765 = vpop.permute.xlu0 %764
      %766 = vrot.lane.b32.xlu0 %v611, 20
      %v767 = vpop.permute.xlu0 %766
      %768 = vrot.lane.b32.xlu0 %v614, 20
      %v769 = vpop.permute.xlu0 %768
      %770 = vrot.lane.b32.xlu0 %v617, 20
      %v771 = vpop.permute.xlu0 %770
      %772 = vrot.lane.b32.xlu0 %v620, 20
      %v773 = vpop.permute.xlu0 %772
      %774 = vrot.lane.b32.xlu0 %v623, 20
      %v775 = vpop.permute.xlu0 %774
      %776 = vrot.lane.b32.xlu0 %v626, 20
      %v777 = vpop.permute.xlu0 %776
      %778 = vrot.lane.b32.xlu0 %v629, 20
      %v779 = vpop.permute.xlu0 %778
      %780 = vrot.lane.b32.xlu0 %v632, 20
      %v781 = vpop.permute.xlu0 %780
      %782 = vrot.lane.b32.xlu0 %v751, 20
      %v783 = vpop.permute.xlu0 %782
      %v786 = vunpack.c.l.b16 %v228
      %v787 = vunpack.c.l.b16 %v229
      %v788 = vpack.c.b16 %v787, %v786
      %789 = vrot.lane.b32.xlu0 %v297, 24
      %v790 = vpop.permute.xlu0 %789
      %791 = vrot.lane.b32.xlu0 %v298, 24
      %v792 = vpop.permute.xlu0 %791
      %793 = vrot.lane.b32.xlu0 %v299, 24
      %v794 = vpop.permute.xlu0 %793
      %795 = vrot.lane.b32.xlu0 %v300, 24
      %v796 = vpop.permute.xlu0 %795
      %797 = vrot.lane.b32.xlu0 %v301, 24
      %v798 = vpop.permute.xlu0 %797
      %799 = vrot.lane.b32.xlu0 %v302, 24
      %v800 = vpop.permute.xlu0 %799
      %801 = vrot.lane.b32.xlu0 %v303, 24
      %v802 = vpop.permute.xlu0 %801
      %803 = vrot.lane.b32.xlu0 %v304, 24
      %v804 = vpop.permute.xlu0 %803
      %805 = vrot.lane.b32.xlu0 %v305, 24
      %v806 = vpop.permute.xlu0 %805
      %807 = vrot.lane.b32.xlu0 %v306, 24
      %v808 = vpop.permute.xlu0 %807
      %809 = vrot.lane.b32.xlu0 %v307, 24
      %v810 = vpop.permute.xlu0 %809
      %811 = vrot.lane.b32.xlu0 %v308, 24
      %v812 = vpop.permute.xlu0 %811
      %813 = vrot.lane.b32.xlu0 %v309, 24
      %v814 = vpop.permute.xlu0 %813
      %815 = vrot.lane.b32.xlu0 %v310, 24
      %v816 = vpop.permute.xlu0 %815
      %817 = vrot.lane.b32.xlu0 %v669, 24
      %v818 = vpop.permute.xlu0 %817
      %819 = vrot.lane.b32.xlu0 %v788, 24
      %v820 = vpop.permute.xlu0 %819
      %v822 = vunpack.c.l.b16 %v230
      %v823 = vpack.c.b16 %v822, %v822
      %v825 = vshrl.u32 %v788, 16
      %v827 = vshll.u32 %v788, 16
      %v829 = vrot.slane %v827, 1
      %v830 = vor.u32 %v825, %v829
      %v832 = vshll.u32 %v823, 16
      %v834 = vrot.slane %v832, 1
      %v835 = vsel %vm359, %v830, %v834
      %836 = vrot.lane.b32.xlu0 %v395, 28
      %v837 = vpop.permute.xlu0 %836
      %838 = vrot.lane.b32.xlu0 %v407, 28
      %v839 = vpop.permute.xlu0 %838
      %840 = vrot.lane.b32.xlu0 %v419, 28
      %v841 = vpop.permute.xlu0 %840
      %842 = vrot.lane.b32.xlu0 %v431, 28
      %v843 = vpop.permute.xlu0 %842
      %844 = vrot.lane.b32.xlu0 %v443, 28
      %v845 = vpop.permute.xlu0 %844
      %846 = vrot.lane.b32.xlu0 %v455, 28
      %v847 = vpop.permute.xlu0 %846
      %848 = vrot.lane.b32.xlu0 %v467, 28
      %v849 = vpop.permute.xlu0 %848
      %850 = vrot.lane.b32.xlu0 %v479, 28
      %v851 = vpop.permute.xlu0 %850
      %852 = vrot.lane.b32.xlu0 %v491, 28
      %v853 = vpop.permute.xlu0 %852
      %854 = vrot.lane.b32.xlu0 %v503, 28
      %v855 = vpop.permute.xlu0 %854
      %856 = vrot.lane.b32.xlu0 %v515, 28
      %v857 = vpop.permute.xlu0 %856
      %858 = vrot.lane.b32.xlu0 %v527, 28
      %v859 = vpop.permute.xlu0 %858
      %860 = vrot.lane.b32.xlu0 %v539, 28
      %v861 = vpop.permute.xlu0 %860
      %862 = vrot.lane.b32.xlu0 %v551, 28
      %v863 = vpop.permute.xlu0 %862
      %864 = vrot.lane.b32.xlu0 %v716, 28
      %v865 = vpop.permute.xlu0 %864
      %866 = vrot.lane.b32.xlu0 %v835, 28
      %v867 = vpop.permute.xlu0 %866
      %v868 = vrot.slane %v788, 1
      %v869 = vrot.slane %v823, 1
      %v870 = vsel %vm584, %v868, %v869
      %871 = vrot.lane.b32.xlu0 %v593, 32
      %v872 = vpop.permute.xlu0 %871
      %873 = vrot.lane.b32.xlu0 %v596, 32
      %v874 = vpop.permute.xlu0 %873
      %875 = vrot.lane.b32.xlu0 %v599, 32
      %v876 = vpop.permute.xlu0 %875
      %877 = vrot.lane.b32.xlu0 %v602, 32
      %v878 = vpop.permute.xlu0 %877
      %879 = vrot.lane.b32.xlu0 %v605, 32
      %v880 = vpop.permute.xlu0 %879
      %881 = vrot.lane.b32.xlu0 %v608, 32
      %v882 = vpop.permute.xlu0 %881
      %883 = vrot.lane.b32.xlu0 %v611, 32
      %v884 = vpop.permute.xlu0 %883
      %885 = vrot.lane.b32.xlu0 %v614, 32
      %v886 = vpop.permute.xlu0 %885
      %887 = vrot.lane.b32.xlu0 %v617, 32
      %v888 = vpop.permute.xlu0 %887
      %889 = vrot.lane.b32.xlu0 %v620, 32
      %v890 = vpop.permute.xlu0 %889
      %891 = vrot.lane.b32.xlu0 %v623, 32
      %v892 = vpop.permute.xlu0 %891
      %893 = vrot.lane.b32.xlu0 %v626, 32
      %v894 = vpop.permute.xlu0 %893
      %895 = vrot.lane.b32.xlu0 %v629, 32
      %v896 = vpop.permute.xlu0 %895
      %897 = vrot.lane.b32.xlu0 %v632, 32
      %v898 = vpop.permute.xlu0 %897
      %899 = vrot.lane.b32.xlu0 %v751, 32
      %v900 = vpop.permute.xlu0 %899
      %901 = vrot.lane.b32.xlu0 %v870, 32
      %v902 = vpop.permute.xlu0 %901
      %vm903 = vcmask 31744
      %v905 = vsel %vm903, %v295, %v553
      %v907 = vsel %vm903, %v296, %v555
      %v909 = vsel %vm903, %v297, %v557
      %v911 = vsel %vm903, %v298, %v559
      %v913 = vsel %vm903, %v299, %v561
      %v915 = vsel %vm903, %v300, %v563
      %v917 = vsel %vm903, %v301, %v565
      %v919 = vsel %vm903, %v302, %v567
      %v921 = vsel %vm903, %v303, %v569
      %v923 = vsel %vm903, %v304, %v571
      %v925 = vsel %vm903, %v305, %v573
      %v927 = vsel %vm903, %v306, %v575
      %v929 = vsel %vm903, %v307, %v577
      %v931 = vsel %vm903, %v308, %v579
      %v933 = vsel %vm903, %v309, %v581
      %v935 = vsel %vm903, %v310, %v583
      %vm936 = vcmask 64512
      %v938 = vsel %vm936, %v905, %v634
      %v940 = vsel %vm936, %v907, %v636
      %v942 = vsel %vm936, %v909, %v638
      %v944 = vsel %vm936, %v911, %v640
      %v946 = vsel %vm936, %v913, %v642
      %v948 = vsel %vm936, %v915, %v644
      %v950 = vsel %vm936, %v917, %v646
      %v952 = vsel %vm936, %v919, %v648
      %v954 = vsel %vm936, %v921, %v650
      %v956 = vsel %vm936, %v923, %v652
      %v958 = vsel %vm936, %v925, %v654
      %v960 = vsel %vm936, %v927, %v656
      %v962 = vsel %vm936, %v929, %v658
      %v964 = vsel %vm936, %v931, %v660
      %v966 = vsel %vm936, %v933, %v662
      %v968 = vsel %vm936, %v935, %v664
      %vm969 = vcmask 97280
      %v971 = vsel %vm969, %v938, %v671
      %v973 = vsel %vm969, %v940, %v673
      %v975 = vsel %vm969, %v942, %v675
      %v977 = vsel %vm969, %v944, %v677
      %v979 = vsel %vm969, %v946, %v679
      %v981 = vsel %vm969, %v948, %v681
      %v983 = vsel %vm969, %v950, %v683
      %v985 = vsel %vm969, %v952, %v685
      %v987 = vsel %vm969, %v954, %v687
      %v989 = vsel %vm969, %v956, %v689
      %v991 = vsel %vm969, %v958, %v691
      %v993 = vsel %vm969, %v960, %v693
      %v995 = vsel %vm969, %v962, %v695
      %v997 = vsel %vm969, %v964, %v697
      %v999 = vsel %vm969, %v966, %v699
      %v1001 = vsel %vm969, %v968, %v701
      %vm1002 = vcmask 130048
      %v1004 = vsel %vm1002, %v971, %v718
      %v1006 = vsel %vm1002, %v973, %v720
      %v1008 = vsel %vm1002, %v975, %v722
      %v1010 = vsel %vm1002, %v977, %v724
      %v1012 = vsel %vm1002, %v979, %v726
      %v1014 = vsel %vm1002, %v981, %v728
      %v1016 = vsel %vm1002, %v983, %v730
      %v1018 = vsel %vm1002, %v985, %v732
      %v1020 = vsel %vm1002, %v987, %v734
      %v1022 = vsel %vm1002, %v989, %v736
      %v1024 = vsel %vm1002, %v991, %v738
      %v1026 = vsel %vm1002, %v993, %v740
      %v1028 = vsel %vm1002, %v995, %v742
      %v1030 = vsel %vm1002, %v997, %v744
      %v1032 = vsel %vm1002, %v999, %v746
      %v1034 = vsel %vm1002, %v1001, %v748
      %vm1035 = vcmask 162816
      %v1037 = vsel %vm1035, %v1004, %v753
      %v1039 = vsel %vm1035, %v1006, %v755
      %v1041 = vsel %vm1035, %v1008, %v757
      %v1043 = vsel %vm1035, %v1010, %v759
      %v1045 = vsel %vm1035, %v1012, %v761
      %v1047 = vsel %vm1035, %v1014, %v763
      %v1049 = vsel %vm1035, %v1016, %v765
      %v1051 = vsel %vm1035, %v1018, %v767
      %v1053 = vsel %vm1035, %v1020, %v769
      %v1055 = vsel %vm1035, %v1022, %v771
      %v1057 = vsel %vm1035, %v1024, %v773
      %v1059 = vsel %vm1035, %v1026, %v775
      %v1061 = vsel %vm1035, %v1028, %v777
      %v1063 = vsel %vm1035, %v1030, %v779
      %v1065 = vsel %vm1035, %v1032, %v781
      %v1067 = vsel %vm1035, %v1034, %v783
      %vm1068 = vcmask 195584
      %v1070 = vsel %vm1068, %v1037, %v790
      %v1072 = vsel %vm1068, %v1039, %v792
      %v1074 = vsel %vm1068, %v1041, %v794
      %v1076 = vsel %vm1068, %v1043, %v796
      %v1078 = vsel %vm1068, %v1045, %v798
      %v1080 = vsel %vm1068, %v1047, %v800
      %v1082 = vsel %vm1068, %v1049, %v802
      %v1084 = vsel %vm1068, %v1051, %v804
      %v1086 = vsel %vm1068, %v1053, %v806
      %v1088 = vsel %vm1068, %v1055, %v808
      %v1090 = vsel %vm1068, %v1057, %v810
      %v1092 = vsel %vm1068, %v1059, %v812
      %v1094 = vsel %vm1068, %v1061, %v814
      %v1096 = vsel %vm1068, %v1063, %v816
      %v1098 = vsel %vm1068, %v1065, %v818
      %v1100 = vsel %vm1068, %v1067, %v820
      %vm1101 = vcmask 228352
      %v1103 = vsel %vm1101, %v1070, %v837
      %v1105 = vsel %vm1101, %v1072, %v839
      %v1107 = vsel %vm1101, %v1074, %v841
      %v1109 = vsel %vm1101, %v1076, %v843
      %v1111 = vsel %vm1101, %v1078, %v845
      %v1113 = vsel %vm1101, %v1080, %v847
      %v1115 = vsel %vm1101, %v1082, %v849
      %v1117 = vsel %vm1101, %v1084, %v851
      %v1119 = vsel %vm1101, %v1086, %v853
      %v1121 = vsel %vm1101, %v1088, %v855
      %v1123 = vsel %vm1101, %v1090, %v857
      %v1125 = vsel %vm1101, %v1092, %v859
      %v1127 = vsel %vm1101, %v1094, %v861
      %v1129 = vsel %vm1101, %v1096, %v863
      %v1131 = vsel %vm1101, %v1098, %v865
      %v1133 = vsel %vm1101, %v1100, %v867
      %vm1134 = vcmask 261120
      %v1136 = vsel %vm1134, %v1103, %v872
      %v1139 = vsel %vm1134, %v1105, %v874
      %v1142 = vsel %vm1134, %v1107, %v876
      %v1145 = vsel %vm1134, %v1109, %v878
      %v1148 = vsel %vm1134, %v1111, %v880
      %v1151 = vsel %vm1134, %v1113, %v882
      %v1154 = vsel %vm1134, %v1115, %v884
      %v1157 = vsel %vm1134, %v1117, %v886
      %v1160 = vsel %vm1134, %v1119, %v888
      %v1163 = vsel %vm1134, %v1121, %v890
      %v1166 = vsel %vm1134, %v1123, %v892
      %v1169 = vsel %vm1134, %v1125, %v894
      %v1172 = vsel %vm1134, %v1127, %v896
      %v1175 = vsel %vm1134, %v1129, %v898
      %v1178 = vsel %vm1134, %v1131, %v900
      %v1181 = vsel %vm1134, %v1133, %v902
      %v1183 = vunpack.c.l.bf16 %v1136
      %v1184 = vunpack.c.h.bf16 %v1136
      %v1185 = vunpack.c.l.bf16 %v1139
      %v1186 = vunpack.c.h.bf16 %v1139
      %v1187 = vunpack.c.l.bf16 %v1142
      %v1188 = vunpack.c.h.bf16 %v1142
      %v1189 = vunpack.c.l.bf16 %v1145
      %v1190 = vunpack.c.h.bf16 %v1145
      %v1191 = vunpack.c.l.bf16 %v1148
      %v1192 = vunpack.c.h.bf16 %v1148
      %v1193 = vunpack.c.l.bf16 %v1151
      %v1194 = vunpack.c.h.bf16 %v1151
      %v1195 = vunpack.c.l.bf16 %v1154
      %v1196 = vunpack.c.h.bf16 %v1154
      %v1197 = vunpack.c.l.bf16 %v1157
      %v1198 = vunpack.c.h.bf16 %v1157
      %v1199 = vunpack.c.l.bf16 %v1160
      %v1200 = vunpack.c.h.bf16 %v1160
      %v1201 = vunpack.c.l.bf16 %v1163
      %v1202 = vunpack.c.h.bf16 %v1163
      %v1203 = vunpack.c.l.bf16 %v1166
      %v1204 = vunpack.c.h.bf16 %v1166
      %v1205 = vunpack.c.l.bf16 %v1169
      %v1206 = vunpack.c.h.bf16 %v1169
      %v1207 = vunpack.c.l.bf16 %v1172
      %v1208 = vunpack.c.h.bf16 %v1172
      %v1209 = vunpack.c.l.bf16 %v1175
      %v1210 = vunpack.c.h.bf16 %v1175
      %v1211 = vunpack.c.l.bf16 %v1178
      %v1212 = vunpack.c.h.bf16 %v1178
      %v1213 = vunpack.c.l.bf16 %v1181
      %v1214 = vunpack.c.h.bf16 %v1181
      %v1215 = vmax.f32 %v1183, 0.0
      %v1216 = vmax.f32 %v1184, 0.0
      %v1217 = vmax.f32 %v1185, 0.0
      %v1218 = vmax.f32 %v1186, 0.0
      %v1219 = vmax.f32 %v1187, 0.0
      %v1220 = vmax.f32 %v1188, 0.0
      %v1221 = vmax.f32 %v1189, 0.0
      %v1222 = vmax.f32 %v1190, 0.0
      %v1223 = vmax.f32 %v1191, 0.0
      %v1224 = vmax.f32 %v1192, 0.0
      %v1225 = vmax.f32 %v1193, 0.0
      %v1226 = vmax.f32 %v1194, 0.0
      %v1227 = vmax.f32 %v1195, 0.0
      %v1228 = vmax.f32 %v1196, 0.0
      %v1229 = vmax.f32 %v1197, 0.0
      %v1230 = vmax.f32 %v1198, 0.0
      %v1231 = vmax.f32 %v1199, 0.0
      %v1232 = vmax.f32 %v1200, 0.0
      %v1233 = vmax.f32 %v1201, 0.0
      %v1234 = vmax.f32 %v1202, 0.0
      %v1235 = vmax.f32 %v1203, 0.0
      %v1236 = vmax.f32 %v1204, 0.0
      %v1237 = vmax.f32 %v1205, 0.0
      %v1238 = vmax.f32 %v1206, 0.0
      %v1239 = vmax.f32 %v1207, 0.0
      %v1240 = vmax.f32 %v1208, 0.0
      %v1241 = vmax.f32 %v1209, 0.0
      %v1242 = vmax.f32 %v1210, 0.0
      %v1243 = vmax.f32 %v1211, 0.0
      %v1244 = vmax.f32 %v1212, 0.0
      %v1245 = vmax.f32 %v1213, 0.0
      %v1246 = vmax.f32 %v1214, 0.0
      %v1247 = vpack.c.bf16 %v1215, %v1215
      %v1248 = vpack.c.bf16 %v1216, %v1216
      %v1249 = vpack.c.bf16 %v1217, %v1217
      %v1250 = vpack.c.bf16 %v1218, %v1218
      %v1251 = vpack.c.bf16 %v1219, %v1219
      %v1252 = vpack.c.bf16 %v1220, %v1220
      %v1253 = vpack.c.bf16 %v1221, %v1221
      %v1254 = vpack.c.bf16 %v1222, %v1222
      %v1255 = vpack.c.bf16 %v1223, %v1223
      %v1256 = vpack.c.bf16 %v1224, %v1224
      %v1257 = vpack.c.bf16 %v1225, %v1225
      %v1258 = vpack.c.bf16 %v1226, %v1226
      %v1259 = vpack.c.bf16 %v1227, %v1227
      %v1260 = vpack.c.bf16 %v1228, %v1228
      %v1261 = vpack.c.bf16 %v1229, %v1229
      %v1262 = vpack.c.bf16 %v1230, %v1230
      %v1263 = vpack.c.bf16 %v1231, %v1231
      %v1264 = vpack.c.bf16 %v1232, %v1232
      %v1265 = vpack.c.bf16 %v1233, %v1233
      %v1266 = vpack.c.bf16 %v1234, %v1234
      %v1267 = vpack.c.bf16 %v1235, %v1235
      %v1268 = vpack.c.bf16 %v1236, %v1236
      %v1269 = vpack.c.bf16 %v1237, %v1237
      %v1270 = vpack.c.bf16 %v1238, %v1238
      %v1271 = vpack.c.bf16 %v1239, %v1239
      %v1272 = vpack.c.bf16 %v1240, %v1240
      %v1273 = vpack.c.bf16 %v1241, %v1241
      %v1274 = vpack.c.bf16 %v1242, %v1242
      %v1275 = vpack.c.bf16 %v1243, %v1243
      %v1276 = vpack.c.bf16 %v1244, %v1244
      %v1277 = vpack.c.bf16 %v1245, %v1245
      %v1278 = vpack.c.bf16 %v1246, %v1246
      %v1279 = vld [vmem:[%s1] sm:$0xf]
      %v1280 = vld [vmem:[%s1 + $0x4] sm:$0xf]
      %v1281 = vld [vmem:[%s1 + $0x8] sm:$0xf]
      %v1282 = vld [vmem:[%s1 + $0xc] sm:$0xf]
      %v1283 = vld [vmem:[%s1 + $0x10] sm:$0x3]
      %v1316 = vunpack.c.l.b16 %v1247
      %v1317 = vunpack.c.l.b16 %v1248
      %v1318 = vunpack.c.l.b16 %v1249
      %v1319 = vunpack.c.l.b16 %v1250
      %v1320 = vunpack.c.l.b16 %v1251
      %v1321 = vunpack.c.l.b16 %v1252
      %v1322 = vunpack.c.l.b16 %v1253
      %v1323 = vunpack.c.l.b16 %v1254
      %v1324 = vunpack.c.l.b16 %v1255
      %v1325 = vunpack.c.l.b16 %v1256
      %v1326 = vunpack.c.l.b16 %v1257
      %v1327 = vunpack.c.l.b16 %v1258
      %v1328 = vunpack.c.l.b16 %v1259
      %v1329 = vunpack.c.l.b16 %v1260
      %v1330 = vunpack.c.l.b16 %v1261
      %v1331 = vunpack.c.l.b16 %v1262
      %v1332 = vunpack.c.l.b16 %v1263
      %v1333 = vunpack.c.l.b16 %v1264
      %v1334 = vunpack.c.l.b16 %v1265
      %v1335 = vunpack.c.l.b16 %v1266
      %v1336 = vunpack.c.l.b16 %v1267
      %v1337 = vunpack.c.l.b16 %v1268
      %v1338 = vunpack.c.l.b16 %v1269
      %v1339 = vunpack.c.l.b16 %v1270
      %v1340 = vunpack.c.l.b16 %v1271
      %v1341 = vunpack.c.l.b16 %v1272
      %v1342 = vunpack.c.l.b16 %v1273
      %v1343 = vunpack.c.l.b16 %v1274
      %v1344 = vunpack.c.l.b16 %v1275
      %v1345 = vunpack.c.l.b16 %v1276
      %v1346 = vunpack.c.l.b16 %v1277
      %v1347 = vunpack.c.l.b16 %v1278
      %v1348 = vpack.c.b16 %v1317, %v1316
      %v1349 = vpack.c.b16 %v1319, %v1318
      %v1350 = vpack.c.b16 %v1321, %v1320
      %v1351 = vpack.c.b16 %v1323, %v1322
      %v1352 = vpack.c.b16 %v1325, %v1324
      %v1353 = vpack.c.b16 %v1327, %v1326
      %v1354 = vpack.c.b16 %v1329, %v1328
      %v1355 = vpack.c.b16 %v1331, %v1330
      %v1356 = vpack.c.b16 %v1333, %v1332
      %v1357 = vpack.c.b16 %v1335, %v1334
      %v1358 = vpack.c.b16 %v1337, %v1336
      %v1359 = vpack.c.b16 %v1339, %v1338
      %v1360 = vpack.c.b16 %v1341, %v1340
      %v1361 = vpack.c.b16 %v1343, %v1342
      %v1362 = vpack.c.b16 %v1345, %v1344
      %v1363 = vpack.c.b16 %v1347, %v1346
      %v1369 = vunpack.c.l.b16 %v1279
      %v1370 = vunpack.c.l.b16 %v1280
      %v1371 = vunpack.c.l.b16 %v1281
      %v1372 = vunpack.c.l.b16 %v1282
      %v1373 = vunpack.c.l.b16 %v1283
      %v1374 = vpack.c.b16 %v1370, %v1369
      %v1375 = vpack.c.b16 %v1372, %v1371
      %v1376 = vpack.c.b16 %v1373, %v1373
      %vm1379 = vcmask 293888
      %v1381 = vsel %vm1379, %v1348, 0
      %v1384 = vsel %vm1379, %v1349, 0
      %v1387 = vsel %vm1379, %v1350, 0
      %v1390 = vsel %vm1379, %v1351, 0
      %v1393 = vsel %vm1379, %v1352, 0
      %v1396 = vsel %vm1379, %v1353, 0
      %v1399 = vsel %vm1379, %v1354, 0
      %v1402 = vsel %vm1379, %v1355, 0
      %v1405 = vsel %vm1379, %v1356, 0
      %v1408 = vsel %vm1379, %v1357, 0
      %v1411 = vsel %vm1379, %v1358, 0
      %v1414 = vsel %vm1379, %v1359, 0
      %v1417 = vsel %vm1379, %v1360, 0
      %v1420 = vsel %vm1379, %v1361, 0
      %v1423 = vsel %vm1379, %v1362, 0
      %v1426 = vsel %vm1379, %v1363, 0
      %vm1428 = vcmask 1041408
      %v1430 = vsel %vm1428, %v1376, 0
      %1432 = vmatpush.bf16.msra.mxu0 0
      %1433 = vmatpush.bf16.msra.mxu0 0
      %1434 = vmatpush.bf16.msra.mxu0 0
      %1435 = vmatpush.bf16.msra.mxu0 0
      %1436 = vmatpush.bf16.msra.mxu0 0
      %1437 = vmatpush.bf16.msra.mxu0 %v1430
      %1438 = vmatpush.bf16.msra.mxu0 %v1375
      %1439 = vmatpush.bf16.msra.mxu0 %v1374
      %1440 = vmatmul.bf16.gmra.mxu0 %v1381
      %v1441 = vpop.f32.mrf.mxu0
      %v1442 = vadd.f32 0.0, %v1441
      %v1443 = vpop.f32.mrf.mxu0
      %v1444 = vadd.f32 0.0, %v1443
      %1445 = vmatmul.bf16.gmra.mxu0 %v1384
      %v1446 = vpop.f32.mrf.mxu0
      %v1447 = vadd.f32 0.0, %v1446
      %v1448 = vpop.f32.mrf.mxu0
      %v1449 = vadd.f32 0.0, %v1448
      %1450 = vmatmul.bf16.gmra.mxu0 %v1387
      %v1451 = vpop.f32.mrf.mxu0
      %v1452 = vadd.f32 0.0, %v1451
      %v1453 = vpop.f32.mrf.mxu0
      %v1454 = vadd.f32 0.0, %v1453
      %1455 = vmatmul.bf16.gmra.mxu0 %v1390
      %v1456 = vpop.f32.mrf.mxu0
      %v1457 = vadd.f32 0.0, %v1456
      %v1458 = vpop.f32.mrf.mxu0
      %v1459 = vadd.f32 0.0, %v1458
      %1460 = vmatmul.bf16.gmra.mxu0 %v1393
      %v1461 = vpop.f32.mrf.mxu0
      %v1462 = vadd.f32 0.0, %v1461
      %v1463 = vpop.f32.mrf.mxu0
      %v1464 = vadd.f32 0.0, %v1463
      %1465 = vmatmul.bf16.gmra.mxu0 %v1396
      %v1466 = vpop.f32.mrf.mxu0
      %v1467 = vadd.f32 0.0, %v1466
      %v1468 = vpop.f32.mrf.mxu0
      %v1469 = vadd.f32 0.0, %v1468
      %1470 = vmatmul.bf16.gmra.mxu0 %v1399
      %v1471 = vpop.f32.mrf.mxu0
      %v1472 = vadd.f32 0.0, %v1471
      %v1473 = vpop.f32.mrf.mxu0
      %v1474 = vadd.f32 0.0, %v1473
      %1475 = vmatmul.bf16.gmra.mxu0 %v1402
      %v1476 = vpop.f32.mrf.mxu0
      %v1477 = vadd.f32 0.0, %v1476
      %v1478 = vpop.f32.mrf.mxu0
      %v1479 = vadd.f32 0.0, %v1478
      %1480 = vmatmul.bf16.gmra.mxu0 %v1405
      %v1481 = vpop.f32.mrf.mxu0
      %v1482 = vadd.f32 0.0, %v1481
      %v1483 = vpop.f32.mrf.mxu0
      %v1484 = vadd.f32 0.0, %v1483
      %1485 = vmatmul.bf16.gmra.mxu0 %v1408
      %v1486 = vpop.f32.mrf.mxu0
      %v1487 = vadd.f32 0.0, %v1486
      %v1488 = vpop.f32.mrf.mxu0
      %v1489 = vadd.f32 0.0, %v1488
      %1490 = vmatmul.bf16.gmra.mxu0 %v1411
      %v1491 = vpop.f32.mrf.mxu0
      %v1492 = vadd.f32 0.0, %v1491
      %v1493 = vpop.f32.mrf.mxu0
      %v1494 = vadd.f32 0.0, %v1493
      %1495 = vmatmul.bf16.gmra.mxu0 %v1414
      %v1496 = vpop.f32.mrf.mxu0
      %v1497 = vadd.f32 0.0, %v1496
      %v1498 = vpop.f32.mrf.mxu0
      %v1499 = vadd.f32 0.0, %v1498
      %1500 = vmatmul.bf16.gmra.mxu0 %v1417
      %v1501 = vpop.f32.mrf.mxu0
      %v1502 = vadd.f32 0.0, %v1501
      %v1503 = vpop.f32.mrf.mxu0
      %v1504 = vadd.f32 0.0, %v1503
      %1505 = vmatmul.bf16.gmra.mxu0 %v1420
      %v1506 = vpop.f32.mrf.mxu0
      %v1507 = vadd.f32 0.0, %v1506
      %v1508 = vpop.f32.mrf.mxu0
      %v1509 = vadd.f32 0.0, %v1508
      %1510 = vmatmul.bf16.gmra.mxu0 %v1423
      %v1511 = vpop.f32.mrf.mxu0
      %v1512 = vadd.f32 0.0, %v1511
      %v1513 = vpop.f32.mrf.mxu0
      %v1514 = vadd.f32 0.0, %v1513
      %1515 = vmatmul.bf16.gmra.mxu0 %v1426
      %v1516 = vpop.f32.mrf.mxu0
      %v1517 = vadd.f32 0.0, %v1516
      %v1518 = vpop.f32.mrf.mxu0
      %v1519 = vadd.f32 0.0, %v1518
      %1520 = vdwg.mxu0
      %v1521 = vadd.f32 %v1442, %v1444
      %v1522 = vadd.f32 %v1521, %v1447
      %v1523 = vadd.f32 %v1522, %v1449
      %v1524 = vadd.f32 %v1523, %v1452
      %v1525 = vadd.f32 %v1524, %v1454
      %v1526 = vadd.f32 %v1525, %v1457
      %v1527 = vadd.f32 %v1526, %v1459
      %v1528 = vadd.f32 %v1527, %v1462
      %v1529 = vadd.f32 %v1528, %v1464
      %v1530 = vadd.f32 %v1529, %v1467
      %v1531 = vadd.f32 %v1530, %v1469
      %v1532 = vadd.f32 %v1531, %v1472
      %v1533 = vadd.f32 %v1532, %v1474
      %v1534 = vadd.f32 %v1533, %v1477
      %v1535 = vadd.f32 %v1534, %v1479
      %v1536 = vadd.f32 %v1535, %v1482
      %v1537 = vadd.f32 %v1536, %v1484
      %v1538 = vadd.f32 %v1537, %v1487
      %v1539 = vadd.f32 %v1538, %v1489
      %v1540 = vadd.f32 %v1539, %v1492
      %v1541 = vadd.f32 %v1540, %v1494
      %v1542 = vadd.f32 %v1541, %v1497
      %v1543 = vadd.f32 %v1542, %v1499
      %v1544 = vadd.f32 %v1543, %v1502
      %v1545 = vadd.f32 %v1544, %v1504
      %v1546 = vadd.f32 %v1545, %v1507
      %v1547 = vadd.f32 %v1546, %v1509
      %v1548 = vadd.f32 %v1547, %v1512
      %v1549 = vadd.f32 %v1548, %v1514
      %v1550 = vadd.f32 %v1549, %v1517
      %v1551 = vadd.f32 %v1550, %v1519
      %v1552 = vrot.slane %v1551, 4
      %v1553 = vadd.f32 %v1551, %v1552
      %v1554 = vrot.slane %v1553, 2
      %v1555 = vadd.f32 %v1553, %v1554
      %v1556 = vrot.slane %v1555, 1
      %v1557 = vadd.f32 %v1555, %v1556
      %1558 = vst [vmem:[%s172] sm:$0x1] %v1557
      %v1559 = vmul.f32 %v1442, %v1442
      %v1560 = vmul.f32 %v1444, %v1444
      %v1561 = vmul.f32 %v1447, %v1447
      %v1562 = vmul.f32 %v1449, %v1449
      %v1563 = vmul.f32 %v1452, %v1452
      %v1564 = vmul.f32 %v1454, %v1454
      %v1565 = vmul.f32 %v1457, %v1457
      %v1566 = vmul.f32 %v1459, %v1459
      %v1567 = vmul.f32 %v1462, %v1462
      %v1568 = vmul.f32 %v1464, %v1464
      %v1569 = vmul.f32 %v1467, %v1467
      %v1570 = vmul.f32 %v1469, %v1469
      %v1571 = vmul.f32 %v1472, %v1472
      %v1572 = vmul.f32 %v1474, %v1474
      %v1573 = vmul.f32 %v1477, %v1477
      %v1574 = vmul.f32 %v1479, %v1479
      %v1575 = vmul.f32 %v1482, %v1482
      %v1576 = vmul.f32 %v1484, %v1484
      %v1577 = vmul.f32 %v1487, %v1487
      %v1578 = vmul.f32 %v1489, %v1489
      %v1579 = vmul.f32 %v1492, %v1492
      %v1580 = vmul.f32 %v1494, %v1494
      %v1581 = vmul.f32 %v1497, %v1497
      %v1582 = vmul.f32 %v1499, %v1499
      %v1583 = vmul.f32 %v1502, %v1502
      %v1584 = vmul.f32 %v1504, %v1504
      %v1585 = vmul.f32 %v1507, %v1507
      %v1586 = vmul.f32 %v1509, %v1509
      %v1587 = vmul.f32 %v1512, %v1512
      %v1588 = vmul.f32 %v1514, %v1514
      %v1589 = vmul.f32 %v1517, %v1517
      %v1590 = vmul.f32 %v1519, %v1519
      %v1591 = vadd.f32 %v1559, %v1560
      %v1592 = vadd.f32 %v1591, %v1561
      %v1593 = vadd.f32 %v1592, %v1562
      %v1594 = vadd.f32 %v1593, %v1563
      %v1595 = vadd.f32 %v1594, %v1564
      %v1596 = vadd.f32 %v1595, %v1565
      %v1597 = vadd.f32 %v1596, %v1566
      %v1598 = vadd.f32 %v1597, %v1567
      %v1599 = vadd.f32 %v1598, %v1568
      %v1600 = vadd.f32 %v1599, %v1569
      %v1601 = vadd.f32 %v1600, %v1570
      %v1602 = vadd.f32 %v1601, %v1571
      %v1603 = vadd.f32 %v1602, %v1572
      %v1604 = vadd.f32 %v1603, %v1573
      %v1605 = vadd.f32 %v1604, %v1574
      %v1606 = vadd.f32 %v1605, %v1575
      %v1607 = vadd.f32 %v1606, %v1576
      %v1608 = vadd.f32 %v1607, %v1577
      %v1609 = vadd.f32 %v1608, %v1578
      %v1610 = vadd.f32 %v1609, %v1579
      %v1611 = vadd.f32 %v1610, %v1580
      %v1612 = vadd.f32 %v1611, %v1581
      %v1613 = vadd.f32 %v1612, %v1582
      %v1614 = vadd.f32 %v1613, %v1583
      %v1615 = vadd.f32 %v1614, %v1584
      %v1616 = vadd.f32 %v1615, %v1585
      %v1617 = vadd.f32 %v1616, %v1586
      %v1618 = vadd.f32 %v1617, %v1587
      %v1619 = vadd.f32 %v1618, %v1588
      %v1620 = vadd.f32 %v1619, %v1589
      %v1621 = vadd.f32 %v1620, %v1590
      %v1622 = vrot.slane %v1621, 4
      %v1623 = vadd.f32 %v1621, %v1622
      %v1624 = vrot.slane %v1623, 2
      %v1625 = vadd.f32 %v1623, %v1624
      %v1626 = vrot.slane %v1625, 1
      %v1627 = vadd.f32 %v1625, %v1626
      %1628 = vst [vmem:[%s175] sm:$0x1] %v1627
      %p1629 = scmp.lt.s32.totalorder %s15, 1
      %s1630 = scalar_select %p1629, %s15, 1
      %s1631 = scalar_lea.vmem %s2, %s1630
      %p1632 = scmp.lt.s32.totalorder %s15, 1
      %s1633 = scalar_select %p1632, %s15, 1
      %s1634 = scalar_lea.vmem %s3, %s1633
      // Predicated region
      $region29: #{relu_conv_bn.2} parent=27 // pred_check
        %p1635 = pneg %p80
      $region30: #{relu_conv_bn.2} parent=27 // pred_check_branch
        %1637 = sbr.rel (%p1635) target = $region32
      $region31: #{relu_conv_bn.2} parent=27 // pred_region
        _
      $region32: #{relu_conv_bn.2} parent=27 // pred_fallthru
        _
      // Predicated region
      $region33: #{relu_conv_bn.2} parent=27 // pred_check
        %p1638 = pneg %p106
      $region34: #{relu_conv_bn.2} parent=27 // pred_check_branch
        %1640 = sbr.rel (%p1638) target = $region36
      $region35: #{relu_conv_bn.2} parent=27 // pred_region
        _
      $region36: #{relu_conv_bn.2} parent=27 // pred_fallthru
        _
    $region28: #{relu_conv_bn.2} parent=5 // pred_fallthru
      _
    %p1641 = scmp.le.s32.totalorder 2, %s10
    // Predicated region
    $region37: #{relu_conv_bn.2} parent=5 // pred_check
      %p1642 = pneg %p1641
    $region38: #{relu_conv_bn.2} parent=5 // pred_check_branch
      %1644 = sbr.rel (%p1642) target = $region40
    $region39: #{relu_conv_bn.2} parent=5 // pred_region
      %s1645 = ssub.s32 %s10, 2
      // Predicated region
      $region41: #{relu_conv_bn.2} parent=39 // pred_check
        %p1646 = pneg %p86
      $region42: #{relu_conv_bn.2} parent=39 // pred_check_branch
        %1648 = sbr.rel (%p1646) target = $region44
      $region43: #{relu_conv_bn.2} parent=39 // pred_region
        %p1649 = scmp.lt.s32.totalorder %s16, 1
        %s1650 = scalar_select %p1649, %s16, 1
        %s1651 = scalar_lea.vmem %s2, %s1650
      $region44: #{relu_conv_bn.2} parent=39 // pred_fallthru
        _
      // Predicated region
      $region45: #{relu_conv_bn.2} parent=39 // pred_check
        %p1652 = pneg %p112
      $region46: #{relu_conv_bn.2} parent=39 // pred_check_branch
        %1654 = sbr.rel (%p1652) target = $region48
      $region47: #{relu_conv_bn.2} parent=39 // pred_region
        %p1655 = scmp.lt.s32.totalorder %s16, 1
        %s1656 = scalar_select %p1655, %s16, 1
        %s1657 = scalar_lea.vmem %s3, %s1656
      $region48: #{relu_conv_bn.2} parent=39 // pred_fallthru
        _
    $region40: #{relu_conv_bn.2} parent=5 // pred_fallthru
      _
  $region6: #{relu_conv_bn.2} parent=0 // loop_footer
    %s14 = sadd.s32 1, %s10
  $region7: #{relu_conv_bn.2} parent=0 // loop_footer_branch
    %9 = sbr.rel target = $region3
  $region8: #{relu_conv_bn.2} parent=0 // loop_exit
    _

// kernel: relu_conv_bn.3
$region0: #{relu_conv_bn.3}
  #allocation0 [shape = 'u32[]', space=smem, size = 0x4, offset = 0x4, fixed_abs, tag = 'smem constant byte address 0x4 - core index']
  #allocation1 [shape = 'u32[72,128]{1,0:T(1,128)}', space=vmem, size = 0x9000, scoped, tag = 'internal scratch']
  %s0 = inlined_call_operand.vmem [shape: bf16[2,18,18,4], index: 0, kind: input, shape index: {}]
  %s1 = inlined_call_operand.vmem [shape: bf16[36,128], index: 1, kind: input, shape index: {}]
  %s2 = inlined_call_operand.vmem [shape: f32[1,128], index: 2, kind: input, shape index: {}]
  %s3 = inlined_call_operand.vmem [shape: f32[1,128], index: 3, kind: input, shape index: {}]
  %s4 = inlined_call_operand.vmem [shape: f32[2,8,256], index: 4, kind: output, shape index: {}]
  %s5 = sld [smem:[#allocation0]]
  $region49: #{relu_conv_bn.3} parent=0
    _
  %s7 = ssub.s32 1, %s5
  %s8 = scalar_select 0, %s7, %s5
  loop: start=0, step=1, limit=4
  $region2: #{relu_conv_bn.3} parent=0 // loop_pre_header
    _
  $region3: #{relu_conv_bn.3} parent=0 // loop_header
    %s10 = sphi 0, %s14
    %p11 = scmp.ge.s32.totalorder %s10, 4
    %s20 = sphi 0, %s22
    %s23 = sphi 0, %s20
    %s24 = sphi 0, %s23
    %s40 = sphi 0, %s24
    %s44 = sphi 0, %s44
    %s46 = sphi 0, %s44
    %s47 = sphi 0, %s46
    %s61 = sphi 0, %s47
    %s65 = sphi 0, %s65
    %s67 = sphi 0, %s65
    %s68 = sphi 0, %s67
    %s82 = sphi 0, %s68
    %s86 = sphi 0, %s86
    %s88 = sphi 0, %s86
    %s89 = sphi 0, %s88
    %s103 = sphi 0, %s89
    %s109 = sphi 0, %s111
    %s112 = sphi 0, %s109
    %s113 = sphi 0, %s112
    %s129 = sphi 0, %s113
  $region4: #{relu_conv_bn.3} parent=0 // loop_header_branch
    %13 = sbr.rel (%p11) target = $region8
  $region5: #{relu_conv_bn.3} parent=0 // loop_body
    %s15 = ssub.s32 %s10, 1
    %s16 = ssub.s32 %s10, 2
    %s17 = sadd.s32 %s10, 1
    %s18 = ssub.s32 %s10, %s17
    %p19 = scmp.eq.s32.totalorder %s18, 0
    %s21 = sadd.s32 %s20, 1
    %s22 = scalar_select %p19, %s20, %s21
    %p25 = pneg %p19
    %p26 = scmp.eq.s32.totalorder %s10, 1
    %p27 = por %p25, %p26
    %p28 = scmp.ne.s32.totalorder %s20, %s23
    %p29 = scmp.eq.s32.totalorder %s10, 0
    %p30 = por %p28, %p29
    %p31 = scmp.ne.s32.totalorder %s20, %s23
    %p32 = scmp.eq.s32.totalorder %s15, 1
    %p33 = por %p31, %p32
    %p34 = scmp.ne.s32.totalorder %s23, %s24
    %p35 = scmp.eq.s32.totalorder %s15, 0
    %p36 = por %p34, %p35
    %p37 = scmp.ne.s32.totalorder %s23, %s24
    %p38 = scmp.eq.s32.totalorder %s16, 1
    %p39 = por %p37, %p38
    %p41 = scmp.ne.s32.totalorder %s24, %s40
    %p42 = scmp.eq.s32.totalorder %s16, 0
    %p43 = por %p41, %p42
    %s45 = sadd.s32 %s44, 1
    %p48 = scmp.eq.s32.totalorder %s10, 1
    %p49 = scmp.ne.s32.totalorder %s44, %s46
    %p50 = scmp.eq.s32.totalorder %s10, 0
    %p51 = por %p49, %p50
    %p52 = scmp.ne.s32.totalorder %s44, %s46
    %p53 = scmp.eq.s32.totalorder %s15, 1
    %p54 = por %p52, %p53
    %p55 = scmp.ne.s32.totalorder %s46, %s47
    %p56 = scmp.eq.s32.totalorder %s15, 0
    %p57 = por %p55, %p56
    %p58 = scmp.ne.s32.totalorder %s46, %s47
    %p59 = scmp.eq.s32.totalorder %s16, 1
    %p60 = por %p58, %p59
    %p62 = scmp.ne.s32.totalorder %s47, %s61
    %p63 = scmp.eq.s32.totalorder %s16, 0
    %p64 = por %p62, %p63
    %s66 = sadd.s32 %s65, 1
    %p69 = scmp.eq.s32.totalorder %s10, 1
    %p70 = scmp.ne.s32.totalorder %s65, %s67
    %p71 = scmp.eq.s32.totalorder %s10, 0
    %p72 = por %p70, %p71
    %p73 = scmp.ne.s32.totalorder %s65, %s67
    %p74 = scmp.eq.s32.totalorder %s15, 1
    %p75 = por %p73, %p74
    %p76 = scmp.ne.s32.totalorder %s67, %s68
    %p77 = scmp.eq.s32.totalorder %s15, 0
    %p78 = por %p76, %p77
    %p79 = scmp.ne.s32.totalorder %s67, %s68
    %p80 = scmp.eq.s32.totalorder %s16, 1
    %p81 = por %p79, %p80
    %p83 = scmp.ne.s32.totalorder %s68, %s82
    %p84 = scmp.eq.s32.totalorder %s16, 0
    %p85 = por %p83, %p84
    %s87 = sadd.s32 %s86, 1
    %p90 = scmp.eq.s32.totalorder %s10, 1
    %p91 = scmp.ne.s32.totalorder %s86, %s88
    %p92 = scmp.eq.s32.totalorder %s10, 0
    %p93 = por %p91, %p92
    %p94 = scmp.ne.s32.totalorder %s86, %s88
    %p95 = scmp.eq.s32.totalorder %s15, 1
    %p96 = por %p94, %p95
    %p97 = scmp.ne.s32.totalorder %s88, %s89
    %p98 = scmp.eq.s32.totalorder %s15, 0
    %p99 = por %p97, %p98
    %p100 = scmp.ne.s32.totalorder %s88, %s89
    %p101 = scmp.eq.s32.totalorder %s16, 1
    %p102 = por %p100, %p101
    %p104 = scmp.ne.s32.totalorder %s89, %s103
    %p105 = scmp.eq.s32.totalorder %s16, 0
    %p106 = por %p104, %p105
    %s107 = ssub.s32 %s10, %s17
    %p108 = scmp.eq.s32.totalorder %s107, 0
    %s110 = sadd.s32 %s109, 1
    %s111 = scalar_select %p108, %s109, %s110
    %p114 = pneg %p108
    %p115 = scmp.eq.s32.totalorder %s10, 1
    %p116 = por %p114, %p115
    %p117 = scmp.ne.s32.totalorder %s109, %s112
    %p118 = scmp.eq.s32.totalorder %s10, 0
    %p119 = por %p117, %p118
    %p120 = scmp.ne.s32.totalorder %s109, %s112
    %p121 = scmp.eq.s32.totalorder %s15, 1
    %p122 = por %p120, %p121
    %p123 = scmp.ne.s32.totalorder %s112, %s113
    %p124 = scmp.eq.s32.totalorder %s15, 0
    %p125 = por %p123, %p124
    %p126 = scmp.ne.s32.totalorder %s112, %s113
    %p127 = scmp.eq.s32.totalorder %s16, 1
    %p128 = por %p126, %p127
    %p130 = scmp.ne.s32.totalorder %s113, %s129
    %p131 = scmp.eq.s32.totalorder %s16, 0
    %p132 = por %p130, %p131
    %p133 = scmp.le.s32.totalorder 1, %s10
    %p134 = scmp.lt.s32.totalorder %s10, 3
    %p135 = pnand %p133, %p134
    %p136 = pneg %p135
    // Predicated region
    $region9: #{relu_conv_bn.3} parent=5 // pred_check
      _
    $region10: #{relu_conv_bn.3} parent=5 // pred_check_branch
      %138 = sbr.rel (%p135) target = $region12
    $region11: #{relu_conv_bn.3} parent=5 // pred_region
      %s139 = ssub.s32 %s10, 1
      // Predicated region
      $region13: #{relu_conv_bn.3} parent=11 // pred_check
        %p140 = pneg %p57
      $region14: #{relu_conv_bn.3} parent=11 // pred_check_branch
        %142 = sbr.rel (%p140) target = $region16
      $region15: #{relu_conv_bn.3} parent=11 // pred_region
        _
      $region16: #{relu_conv_bn.3} parent=11 // pred_fallthru
        _
      // Predicated region
      $region17: #{relu_conv_bn.3} parent=11 // pred_check
        %p143 = pneg %p78
      $region18: #{relu_conv_bn.3} parent=11 // pred_check_branch
        %145 = sbr.rel (%p143) target = $region20
      $region19: #{relu_conv_bn.3} parent=11 // pred_region
        _
      $region20: #{relu_conv_bn.3} parent=11 // pred_fallthru
        _
      // Predicated region
      $region21: #{relu_conv_bn.3} parent=11 // pred_check
        %p146 = pneg %p99
      $region22: #{relu_conv_bn.3} parent=11 // pred_check_branch
        %148 = sbr.rel (%p146) target = $region24
      $region23: #{relu_conv_bn.3} parent=11 // pred_region
        _
      $region24: #{relu_conv_bn.3} parent=11 // pred_fallthru
        _
    $region12: #{relu_conv_bn.3} parent=5 // pred_fallthru
      _
    %p149 = scmp.lt.s32.totalorder %s10, 2
    // Predicated region
    $region25: #{relu_conv_bn.3} parent=5 // pred_check
      %p150 = pneg %p149
    $region26: #{relu_conv_bn.3} parent=5 // pred_check_branch
      %152 = sbr.rel (%p150) target = $region28
    $region27: #{relu_conv_bn.3} parent=5 // pred_region
      // Predicated region
      $region29: #{relu_conv_bn.3} parent=27 // pred_check
        %p153 = pneg %p30
      $region30: #{relu_conv_bn.3} parent=27 // pred_check_branch
        %155 = sbr.rel (%p153) target = $region32
      $region31: #{relu_conv_bn.3} parent=27 // pred_region
        %p156 = scmp.lt.s32.totalorder %s10, 1
        %s157 = scalar_select %p156, %s10, 1
        %s158 = smul.addr %s157, 54
        %s159 = smul.addr %s158, 4
        %s160 = scalar_lea.vmem %s0, %s159
      $region32: #{relu_conv_bn.3} parent=27 // pred_fallthru
        _
    $region28: #{relu_conv_bn.3} parent=5 // pred_fallthru
      _
    %p161 = scmp.le.s32.totalorder 1, %s10
    %p162 = scmp.lt.s32.totalorder %s10, 3
    %p163 = pnand %p161, %p162
    %p164 = pneg %p163
    // Predicated region
    $region33: #{relu_conv_bn.3} parent=5 // pred_check
      _
    $region34: #{relu_conv_bn.3} parent=5 // pred_check_branch
      %166 = sbr.rel (%p163) target = $region36
    $region35: #{relu_conv_bn.3} parent=5 // pred_region
      %s167 = ssub.s32 %s10, 1
      %p168 = scmp.lt.s32.totalorder %s15, 1
      %s169 = scalar_select %p168, %s15, 1
      %s170 = smul.addr %s169, 54
      %s171 = smul.addr %s170, 4
      %s172 = scalar_lea.vmem %s0, %s171
      %p173 = pneg %p36
      %p174 = pneg %p33
      %p175 = pneg %p57
      %p176 = pneg %p54
      %p177 = pneg %p78
      %p178 = pneg %p75
      %p179 = pneg %p99
      %p180 = pneg %p96
      %p181 = pneg %p125
      %p182 = pneg %p122
      %p183 = scmp.lt.s32.totalorder %s15, 1
      %s184 = scalar_select %p183, %s15, 1
      %s185 = smul.addr %s184, 2
      %s186 = smul.addr %s185, 8
      %s187 = scalar_lea.vmem %s4, %s186
      %p188 = scmp.lt.s32.totalorder %s15, 1
      %s189 = scalar_select %p188, %s15, 1
      %s190 = smul.addr %s189, 54
      %s191 = smul.addr %s190, 4
      %s192 = scalar_lea.vmem %s0, %s191
      %p193 = scmp.lt.s32.totalorder %s15, 1
      %s194 = scalar_select %p193, %s15, 1
      %s195 = smul.addr %s194, 2
      %s196 = smul.addr %s195, 8
      %s197 = scalar_lea.vmem %s4, %s196
      %v199 = vld [vmem:[%s192] sm:$0xf]
      %v200 = vld [vmem:[%s192 + $0x4] sm:$0xf]
      %v201 = vld [vmem:[%s192 + $0x8] sm:$0x1]
      %v202 = vld [vmem:[%s192 + $0xc] sm:$0xf]
      %v203 = vld [vmem:[%s192 + $0x10] sm:$0xf]
      %v204 = vld [vmem:[%s192 + $0x14] sm:$0x1]
      %v205 = vld [vmem:[%s192 + $0x18] sm:$0xf]
      %v206 = vld [vmem:[%s192 + $0x1c] sm:$0xf]
      %v207 = vld [vmem:[%s192 + $0x20] sm:$0x1]
      %v208 = vld [vmem:[%s192 + $0x24] sm:$0xf]
      %v209 = vld [vmem:[%s192 + $0x28] sm:$0xf]
      %v210 = vld [vmem:[%s192 + $0x2c] sm:$0x1]
      %v211 = vld [vmem:[%s192 + $0x30] sm:$0xf]
      %v212 = vld [vmem:[%s192 + $0x34] sm:$0xf]
      %v213 = vld [vmem:[%s192 + $0x38] sm:$0x1]
      %v214 = vld [vmem:[%s192 + $0x3c] sm:$0xf]
      %v215 = vld [vmem:[%s192 + $0x40] sm:$0xf]
      %v216 = vld [vmem:[%s192 + $0x44] sm:$0x1]
      %v217 = vld [vmem:[%s192 + $0x48] sm:$0xf]
      %v218 = vld [vmem:[%s192 + $0x4c] sm:$0xf]
      %v219 = vld [vmem:[%s192 + $0x50] sm:$0x1]
      %v220 = vld [vmem:[%s192 + $0x54] sm:$0xf]
      %v221 = vld [vmem:[%s192 + $0x58] sm:$0xf]
      %v222 = vld [vmem:[%s192 + $0x5c] sm:$0x1]
      %v223 = vld [vmem:[%s192 + $0x60] sm:$0xf]
      %v224 = vld [vmem:[%s192 + $0x64] sm:$0xf]
      %v225 = vld [vmem:[%s192 + $0x68] sm:$0x1]
      %v226 = vld [vmem:[%s192 + $0x6c] sm:$0xf]
      %v227 = vld [vmem:[%s192 + $0x70] sm:$0xf]
      %v228 = vld [vmem:[%s192 + $0x74] sm:$0x1]
      %v229 = vld [vmem:[%s192 + $0x78] sm:$0xf]
      %v230 = vld [vmem:[%s192 + $0x7c] sm:$0xf]
      %v231 = vld [vmem:[%s192 + $0x80] sm:$0x1]
      %v232 = vld [vmem:[%s192 + $0x84] sm:$0xf]
      %v233 = vld [vmem:[%s192 + $0x88] sm:$0xf]
      %v234 = vld [vmem:[%s192 + $0x8c] sm:$0x1]
      %v235 = vld [vmem:[%s192 + $0x90] sm:$0xf]
      %v236 = vld [vmem:[%s192 + $0x94] sm:$0xf]
      %v237 = vld [vmem:[%s192 + $0x98] sm:$0x1]
      %v238 = vld [vmem:[%s192 + $0x9c] sm:$0xf]
      %v239 = vld [vmem:[%s192 + $0xa0] sm:$0xf]
      %v240 = vld [vmem:[%s192 + $0xa4] sm:$0x1]
      %v241 = vld [vmem:[%s192 + $0xa8] sm:$0xf]
      %v242 = vld [vmem:[%s192 + $0xac] sm:$0xf]
      %v243 = vld [vmem:[%s192 + $0xb0] sm:$0x1]
      %v244 = vld [vmem:[%s192 + $0xb4] sm:$0xf]
      %v245 = vld [vmem:[%s192 + $0xb8] sm:$0xf]
      %v246 = vld [vmem:[%s192 + $0xbc] sm:$0x1]
      %v247 = vld [vmem:[%s192 + $0xc0] sm:$0xf]
      %v248 = vld [vmem:[%s192 + $0xc4] sm:$0xf]
      %v249 = vld [vmem:[%s192 + $0xc8] sm:$0x1]
      %v250 = vld [vmem:[%s192 + $0xcc] sm:$0xf]
      %v251 = vld [vmem:[%s192 + $0xd0] sm:$0xf]
      %v252 = vld [vmem:[%s192 + $0xd4] sm:$0x1]
      %v285 = vunpack.c.l.b16 %v199
      %v286 = vunpack.c.l.b16 %v200
      %v287 = vunpack.c.l.b16 %v202
      %v288 = vunpack.c.l.b16 %v203
      %v289 = vunpack.c.l.b16 %v205
      %v290 = vunpack.c.l.b16 %v206
      %v291 = vunpack.c.l.b16 %v208
      %v292 = vunpack.c.l.b16 %v209
      %v293 = vunpack.c.l.b16 %v211
      %v294 = vunpack.c.l.b16 %v212
      %v295 = vunpack.c.l.b16 %v214
      %v296 = vunpack.c.l.b16 %v215
      %v297 = vunpack.c.l.b16 %v217
      %v298 = vunpack.c.l.b16 %v218
      %v299 = vunpack.c.l.b16 %v220
      %v300 = vunpack.c.l.b16 %v221
      %v301 = vunpack.c.l.b16 %v223
      %v302 = vunpack.c.l.b16 %v224
      %v303 = vunpack.c.l.b16 %v226
      %v304 = vunpack.c.l.b16 %v227
      %v305 = vunpack.c.l.b16 %v229
      %v306 = vunpack.c.l.b16 %v230
      %v307 = vunpack.c.l.b16 %v232
      %v308 = vunpack.c.l.b16 %v233
      %v309 = vunpack.c.l.b16 %v235
      %v310 = vunpack.c.l.b16 %v236
      %v311 = vunpack.c.l.b16 %v238
      %v312 = vunpack.c.l.b16 %v239
      %v313 = vunpack.c.l.b16 %v241
      %v314 = vunpack.c.l.b16 %v242
      %v315 = vunpack.c.l.b16 %v244
      %v316 = vunpack.c.l.b16 %v245
      %v317 = vpack.c.b16 %v286, %v285
      %v318 = vpack.c.b16 %v288, %v287
      %v319 = vpack.c.b16 %v290, %v289
      %v320 = vpack.c.b16 %v292, %v291
      %v321 = vpack.c.b16 %v294, %v293
      %v322 = vpack.c.b16 %v296, %v295
      %v323 = vpack.c.b16 %v298, %v297
      %v324 = vpack.c.b16 %v300, %v299
      %v325 = vpack.c.b16 %v302, %v301
      %v326 = vpack.c.b16 %v304, %v303
      %v327 = vpack.c.b16 %v306, %v305
      %v328 = vpack.c.b16 %v308, %v307
      %v329 = vpack.c.b16 %v310, %v309
      %v330 = vpack.c.b16 %v312, %v311
      %v331 = vpack.c.b16 %v314, %v313
      %v332 = vpack.c.b16 %v316, %v315
      %v349 = vunpack.c.l.b16 %v201
      %v350 = vunpack.c.l.b16 %v204
      %v351 = vunpack.c.l.b16 %v207
      %v352 = vunpack.c.l.b16 %v210
      %v353 = vunpack.c.l.b16 %v213
      %v354 = vunpack.c.l.b16 %v216
      %v355 = vunpack.c.l.b16 %v219
      %v356 = vunpack.c.l.b16 %v222
      %v357 = vunpack.c.l.b16 %v225
      %v358 = vunpack.c.l.b16 %v228
      %v359 = vunpack.c.l.b16 %v231
      %v360 = vunpack.c.l.b16 %v234
      %v361 = vunpack.c.l.b16 %v237
      %v362 = vunpack.c.l.b16 %v240
      %v363 = vunpack.c.l.b16 %v243
      %v364 = vunpack.c.l.b16 %v246
      %v365 = vpack.c.b16 %v349, %v349
      %v366 = vpack.c.b16 %v350, %v350
      %v367 = vpack.c.b16 %v351, %v351
      %v368 = vpack.c.b16 %v352, %v352
      %v369 = vpack.c.b16 %v353, %v353
      %v370 = vpack.c.b16 %v354, %v354
      %v371 = vpack.c.b16 %v355, %v355
      %v372 = vpack.c.b16 %v356, %v356
      %v373 = vpack.c.b16 %v357, %v357
      %v374 = vpack.c.b16 %v358, %v358
      %v375 = vpack.c.b16 %v359, %v359
      %v376 = vpack.c.b16 %v360, %v360
      %v377 = vpack.c.b16 %v361, %v361
      %v378 = vpack.c.b16 %v362, %v362
      %v379 = vpack.c.b16 %v363, %v363
      %v380 = vpack.c.b16 %v364, %v364
      %vm381 = vsmask.f32 7424
      %v383 = vshrl.u32 %v317, 16
      %v385 = vshll.u32 %v317, 16
      %v387 = vrot.slane %v385, 1
      %v388 = vor.u32 %v383, %v387
      %v390 = vshll.u32 %v365, 16
      %v392 = vrot.slane %v390, 1
      %v393 = vsel %vm381, %v388, %v392
      %v395 = vshrl.u32 %v318, 16
      %v397 = vshll.u32 %v318, 16
      %v399 = vrot.slane %v397, 1
      %v400 = vor.u32 %v395, %v399
      %v402 = vshll.u32 %v366, 16
      %v404 = vrot.slane %v402, 1
      %v405 = vsel %vm381, %v400, %v404
      %v407 = vshrl.u32 %v319, 16
      %v409 = vshll.u32 %v319, 16
      %v411 = vrot.slane %v409, 1
      %v412 = vor.u32 %v407, %v411
      %v414 = vshll.u32 %v367, 16
      %v416 = vrot.slane %v414, 1
      %v417 = vsel %vm381, %v412, %v416
      %v419 = vshrl.u32 %v320, 16
      %v421 = vshll.u32 %v320, 16
      %v423 = vrot.slane %v421, 1
      %v424 = vor.u32 %v419, %v423
      %v426 = vshll.u32 %v368, 16
      %v428 = vrot.slane %v426, 1
      %v429 = vsel %vm381, %v424, %v428
      %v431 = vshrl.u32 %v321, 16
      %v433 = vshll.u32 %v321, 16
      %v435 = vrot.slane %v433, 1
      %v436 = vor.u32 %v431, %v435
      %v438 = vshll.u32 %v369, 16
      %v440 = vrot.slane %v438, 1
      %v441 = vsel %vm381, %v436, %v440
      %v443 = vshrl.u32 %v322, 16
      %v445 = vshll.u32 %v322, 16
      %v447 = vrot.slane %v445, 1
      %v448 = vor.u32 %v443, %v447
      %v450 = vshll.u32 %v370, 16
      %v452 = vrot.slane %v450, 1
      %v453 = vsel %vm381, %v448, %v452
      %v455 = vshrl.u32 %v323, 16
      %v457 = vshll.u32 %v323, 16
      %v459 = vrot.slane %v457, 1
      %v460 = vor.u32 %v455, %v459
      %v462 = vshll.u32 %v371, 16
      %v464 = vrot.slane %v462, 1
      %v465 = vsel %vm381, %v460, %v464
      %v467 = vshrl.u32 %v324, 16
      %v469 = vshll.u32 %v324, 16
      %v471 = vrot.slane %v469, 1
      %v472 = vor.u32 %v467, %v471
      %v474 = vshll.u32 %v372, 16
      %v476 = vrot.slane %v474, 1
      %v477 = vsel %vm381, %v472, %v476
      %v479 = vshrl.u32 %v325, 16
      %v481 = vshll.u32 %v325, 16
      %v483 = vrot.slane %v481, 1
      %v484 = vor.u32 %v479, %v483
      %v486 = vshll.u32 %v373, 16
      %v488 = vrot.slane %v486, 1
      %v489 = vsel %vm381, %v484, %v488
      %v491 = vshrl.u32 %v326, 16
      %v493 = vshll.u32 %v326, 16
      %v495 = vrot.slane %v493, 1
      %v496 = vor.u32 %v491, %v495
      %v498 = vshll.u32 %v374, 16
      %v500 = vrot.slane %v498, 1
      %v501 = vsel %vm381, %v496, %v500
      %v503 = vshrl.u32 %v327, 16
      %v505 = vshll.u32 %v327, 16
      %v507 = vrot.slane %v505, 1
      %v508 = vor.u32 %v503, %v507
      %v510 = vshll.u32 %v375, 16
      %v512 = vrot.slane %v510, 1
      %v513 = vsel %vm381, %v508, %v512
      %v515 = vshrl.u32 %v328, 16
      %v517 = vshll.u32 %v328, 16
      %v519 = vrot.slane %v517, 1
      %v520 = vor.u32 %v515, %v519
      %v522 = vshll.u32 %v376, 16
      %v524 = vrot.slane %v522, 1
      %v525 = vsel %vm381, %v520, %v524
      %v527 = vshrl.u32 %v329, 16
      %v529 = vshll.u32 %v329, 16
      %v531 = vrot.slane %v529, 1
      %v532 = vor.u32 %v527, %v531
      %v534 = vshll.u32 %v377, 16
      %v536 = vrot.slane %v534, 1
      %v537 = vsel %vm381, %v532, %v536
      %v539 = vshrl.u32 %v330, 16
      %v541 = vshll.u32 %v330, 16
      %v543 = vrot.slane %v541, 1
      %v544 = vor.u32 %v539, %v543
      %v546 = vshll.u32 %v378, 16
      %v548 = vrot.slane %v546, 1
      %v549 = vsel %vm381, %v544, %v548
      %v551 = vshrl.u32 %v331, 16
      %v553 = vshll.u32 %v331, 16
      %v555 = vrot.slane %v553, 1
      %v556 = vor.u32 %v551, %v555
      %v558 = vshll.u32 %v379, 16
      %v560 = vrot.slane %v558, 1
      %v561 = vsel %vm381, %v556, %v560
      %v563 = vshrl.u32 %v332, 16
      %v565 = vshll.u32 %v332, 16
      %v567 = vrot.slane %v565, 1
      %v568 = vor.u32 %v563, %v567
      %v570 = vshll.u32 %v380, 16
      %v572 = vrot.slane %v570, 1
      %v573 = vsel %vm381, %v568, %v572
      %574 = vrot.lane.b32.xlu0 %v393, 4
      %v575 = vpop.permute.xlu0 %574
      %576 = vrot.lane.b32.xlu0 %v405, 4
      %v577 = vpop.permute.xlu0 %576
      %578 = vrot.lane.b32.xlu0 %v417, 4
      %v579 = vpop.permute.xlu0 %578
      %580 = vrot.lane.b32.xlu0 %v429, 4
      %v581 = vpop.permute.xlu0 %580
      %582 = vrot.lane.b32.xlu0 %v441, 4
      %v583 = vpop.permute.xlu0 %582
      %584 = vrot.lane.b32.xlu0 %v453, 4
      %v585 = vpop.permute.xlu0 %584
      %586 = vrot.lane.b32.xlu0 %v465, 4
      %v587 = vpop.permute.xlu0 %586
      %588 = vrot.lane.b32.xlu0 %v477, 4
      %v589 = vpop.permute.xlu0 %588
      %590 = vrot.lane.b32.xlu0 %v489, 4
      %v591 = vpop.permute.xlu0 %590
      %592 = vrot.lane.b32.xlu0 %v501, 4
      %v593 = vpop.permute.xlu0 %592
      %594 = vrot.lane.b32.xlu0 %v513, 4
      %v595 = vpop.permute.xlu0 %594
      %596 = vrot.lane.b32.xlu0 %v525, 4
      %v597 = vpop.permute.xlu0 %596
      %598 = vrot.lane.b32.xlu0 %v537, 4
      %v599 = vpop.permute.xlu0 %598
      %600 = vrot.lane.b32.xlu0 %v549, 4
      %v601 = vpop.permute.xlu0 %600
      %602 = vrot.lane.b32.xlu0 %v561, 4
      %v603 = vpop.permute.xlu0 %602
      %604 = vrot.lane.b32.xlu0 %v573, 4
      %v605 = vpop.permute.xlu0 %604
      %vm606 = vcmask 1046528
      %v607 = vrot.slane %v317, 1
      %v608 = vrot.slane %v365, 1
      %v609 = vsel %vm606, %v607, %v608
      %v610 = vrot.slane %v318, 1
      %v611 = vrot.slane %v366, 1
      %v612 = vsel %vm606, %v610, %v611
      %v613 = vrot.slane %v319, 1
      %v614 = vrot.slane %v367, 1
      %v615 = vsel %vm606, %v613, %v614
      %v616 = vrot.slane %v320, 1
      %v617 = vrot.slane %v368, 1
      %v618 = vsel %vm606, %v616, %v617
      %v619 = vrot.slane %v321, 1
      %v620 = vrot.slane %v369, 1
      %v621 = vsel %vm606, %v619, %v620
      %v622 = vrot.slane %v322, 1
      %v623 = vrot.slane %v370, 1
      %v624 = vsel %vm606, %v622, %v623
      %v625 = vrot.slane %v323, 1
      %v626 = vrot.slane %v371, 1
      %v627 = vsel %vm606, %v625, %v626
      %v628 = vrot.slane %v324, 1
      %v629 = vrot.slane %v372, 1
      %v630 = vsel %vm606, %v628, %v629
      %v631 = vrot.slane %v325, 1
      %v632 = vrot.slane %v373, 1
      %v633 = vsel %vm606, %v631, %v632
      %v634 = vrot.slane %v326, 1
      %v635 = vrot.slane %v374, 1
      %v636 = vsel %vm606, %v634, %v635
      %v637 = vrot.slane %v327, 1
      %v638 = vrot.slane %v375, 1
      %v639 = vsel %vm606, %v637, %v638
      %v640 = vrot.slane %v328, 1
      %v641 = vrot.slane %v376, 1
      %v642 = vsel %vm606, %v640, %v641
      %v643 = vrot.slane %v329, 1
      %v644 = vrot.slane %v377, 1
      %v645 = vsel %vm606, %v643, %v644
      %v646 = vrot.slane %v330, 1
      %v647 = vrot.slane %v378, 1
      %v648 = vsel %vm606, %v646, %v647
      %v649 = vrot.slane %v331, 1
      %v650 = vrot.slane %v379, 1
      %v651 = vsel %vm606, %v649, %v650
      %v652 = vrot.slane %v332, 1
      %v653 = vrot.slane %v380, 1
      %v654 = vsel %vm606, %v652, %v653
      %655 = vrot.lane.b32.xlu0 %v609, 8
      %v656 = vpop.permute.xlu0 %655
      %657 = vrot.lane.b32.xlu0 %v612, 8
      %v658 = vpop.permute.xlu0 %657
      %659 = vrot.lane.b32.xlu0 %v615, 8
      %v660 = vpop.permute.xlu0 %659
      %661 = vrot.lane.b32.xlu0 %v618, 8
      %v662 = vpop.permute.xlu0 %661
      %663 = vrot.lane.b32.xlu0 %v621, 8
      %v664 = vpop.permute.xlu0 %663
      %665 = vrot.lane.b32.xlu0 %v624, 8
      %v666 = vpop.permute.xlu0 %665
      %667 = vrot.lane.b32.xlu0 %v627, 8
      %v668 = vpop.permute.xlu0 %667
      %669 = vrot.lane.b32.xlu0 %v630, 8
      %v670 = vpop.permute.xlu0 %669
      %671 = vrot.lane.b32.xlu0 %v633, 8
      %v672 = vpop.permute.xlu0 %671
      %673 = vrot.lane.b32.xlu0 %v636, 8
      %v674 = vpop.permute.xlu0 %673
      %675 = vrot.lane.b32.xlu0 %v639, 8
      %v676 = vpop.permute.xlu0 %675
      %677 = vrot.lane.b32.xlu0 %v642, 8
      %v678 = vpop.permute.xlu0 %677
      %679 = vrot.lane.b32.xlu0 %v645, 8
      %v680 = vpop.permute.xlu0 %679
      %681 = vrot.lane.b32.xlu0 %v648, 8
      %v682 = vpop.permute.xlu0 %681
      %683 = vrot.lane.b32.xlu0 %v651, 8
      %v684 = vpop.permute.xlu0 %683
      %685 = vrot.lane.b32.xlu0 %v654, 8
      %v686 = vpop.permute.xlu0 %685
      %v689 = vunpack.c.l.b16 %v247
      %v690 = vunpack.c.l.b16 %v248
      %v691 = vpack.c.b16 %v690, %v689
      %692 = vrot.lane.b32.xlu0 %v318, 12
      %v693 = vpop.permute.xlu0 %692
      %694 = vrot.lane.b32.xlu0 %v319, 12
      %v695 = vpop.permute.xlu0 %694
      %696 = vrot.lane.b32.xlu0 %v320, 12
      %v697 = vpop.permute.xlu0 %696
      %698 = vrot.lane.b32.xlu0 %v321, 12
      %v699 = vpop.permute.xlu0 %698
      %700 = vrot.lane.b32.xlu0 %v322, 12
      %v701 = vpop.permute.xlu0 %700
      %702 = vrot.lane.b32.xlu0 %v323, 12
      %v703 = vpop.permute.xlu0 %702
      %704 = vrot.lane.b32.xlu0 %v324, 12
      %v705 = vpop.permute.xlu0 %704
      %706 = vrot.lane.b32.xlu0 %v325, 12
      %v707 = vpop.permute.xlu0 %706
      %708 = vrot.lane.b32.xlu0 %v326, 12
      %v709 = vpop.permute.xlu0 %708
      %710 = vrot.lane.b32.xlu0 %v327, 12
      %v711 = vpop.permute.xlu0 %710
      %712 = vrot.lane.b32.xlu0 %v328, 12
      %v713 = vpop.permute.xlu0 %712
      %714 = vrot.lane.b32.xlu0 %v329, 12
      %v715 = vpop.permute.xlu0 %714
      %716 = vrot.lane.b32.xlu0 %v330, 12
      %v717 = vpop.permute.xlu0 %716
      %718 = vrot.lane.b32.xlu0 %v331, 12
      %v719 = vpop.permute.xlu0 %718
      %720 = vrot.lane.b32.xlu0 %v332, 12
      %v721 = vpop.permute.xlu0 %720
      %722 = vrot.lane.b32.xlu0 %v691, 12
      %v723 = vpop.permute.xlu0 %722
      %v725 = vunpack.c.l.b16 %v249
      %v726 = vpack.c.b16 %v725, %v725
      %v728 = vshrl.u32 %v691, 16
      %v730 = vshll.u32 %v691, 16
      %v732 = vrot.slane %v730, 1
      %v733 = vor.u32 %v728, %v732
      %v735 = vshll.u32 %v726, 16
      %v737 = vrot.slane %v735, 1
      %v738 = vsel %vm381, %v733, %v737
      %739 = vrot.lane.b32.xlu0 %v405, 16
      %v740 = vpop.permute.xlu0 %739
      %741 = vrot.lane.b32.xlu0 %v417, 16
      %v742 = vpop.permute.xlu0 %741
      %743 = vrot.lane.b32.xlu0 %v429, 16
      %v744 = vpop.permute.xlu0 %743
      %745 = vrot.lane.b32.xlu0 %v441, 16
      %v746 = vpop.permute.xlu0 %745
      %747 = vrot.lane.b32.xlu0 %v453, 16
      %v748 = vpop.permute.xlu0 %747
      %749 = vrot.lane.b32.xlu0 %v465, 16
      %v750 = vpop.permute.xlu0 %749
      %751 = vrot.lane.b32.xlu0 %v477, 16
      %v752 = vpop.permute.xlu0 %751
      %753 = vrot.lane.b32.xlu0 %v489, 16
      %v754 = vpop.permute.xlu0 %753
      %755 = vrot.lane.b32.xlu0 %v501, 16
      %v756 = vpop.permute.xlu0 %755
      %757 = vrot.lane.b32.xlu0 %v513, 16
      %v758 = vpop.permute.xlu0 %757
      %759 = vrot.lane.b32.xlu0 %v525, 16
      %v760 = vpop.permute.xlu0 %759
      %761 = vrot.lane.b32.xlu0 %v537, 16
      %v762 = vpop.permute.xlu0 %761
      %763 = vrot.lane.b32.xlu0 %v549, 16
      %v764 = vpop.permute.xlu0 %763
      %765 = vrot.lane.b32.xlu0 %v561, 16
      %v766 = vpop.permute.xlu0 %765
      %767 = vrot.lane.b32.xlu0 %v573, 16
      %v768 = vpop.permute.xlu0 %767
      %769 = vrot.lane.b32.xlu0 %v738, 16
      %v770 = vpop.permute.xlu0 %769
      %v771 = vrot.slane %v691, 1
      %v772 = vrot.slane %v726, 1
      %v773 = vsel %vm606, %v771, %v772
      %774 = vrot.lane.b32.xlu0 %v612, 20
      %v775 = vpop.permute.xlu0 %774
      %776 = vrot.lane.b32.xlu0 %v615, 20
      %v777 = vpop.permute.xlu0 %776
      %778 = vrot.lane.b32.xlu0 %v618, 20
      %v779 = vpop.permute.xlu0 %778
      %780 = vrot.lane.b32.xlu0 %v621, 20
      %v781 = vpop.permute.xlu0 %780
      %782 = vrot.lane.b32.xlu0 %v624, 20
      %v783 = vpop.permute.xlu0 %782
      %784 = vrot.lane.b32.xlu0 %v627, 20
      %v785 = vpop.permute.xlu0 %784
      %786 = vrot.lane.b32.xlu0 %v630, 20
      %v787 = vpop.permute.xlu0 %786
      %788 = vrot.lane.b32.xlu0 %v633, 20
      %v789 = vpop.permute.xlu0 %788
      %790 = vrot.lane.b32.xlu0 %v636, 20
      %v791 = vpop.permute.xlu0 %790
      %792 = vrot.lane.b32.xlu0 %v639, 20
      %v793 = vpop.permute.xlu0 %792
      %794 = vrot.lane.b32.xlu0 %v642, 20
      %v795 = vpop.permute.xlu0 %794
      %796 = vrot.lane.b32.xlu0 %v645, 20
      %v797 = vpop.permute.xlu0 %796
      %798 = vrot.lane.b32.xlu0 %v648, 20
      %v799 = vpop.permute.xlu0 %798
      %800 = vrot.lane.b32.xlu0 %v651, 20
      %v801 = vpop.permute.xlu0 %800
      %802 = vrot.lane.b32.xlu0 %v654, 20
      %v803 = vpop.permute.xlu0 %802
      %804 = vrot.lane.b32.xlu0 %v773, 20
      %v805 = vpop.permute.xlu0 %804
      %v808 = vunpack.c.l.b16 %v250
      %v809 = vunpack.c.l.b16 %v251
      %v810 = vpack.c.b16 %v809, %v808
      %811 = vrot.lane.b32.xlu0 %v319, 24
      %v812 = vpop.permute.xlu0 %811
      %813 = vrot.lane.b32.xlu0 %v320, 24
      %v814 = vpop.permute.xlu0 %813
      %815 = vrot.lane.b32.xlu0 %v321, 24
      %v816 = vpop.permute.xlu0 %815
      %817 = vrot.lane.b32.xlu0 %v322, 24
      %v818 = vpop.permute.xlu0 %817
      %819 = vrot.lane.b32.xlu0 %v323, 24
      %v820 = vpop.permute.xlu0 %819
      %821 = vrot.lane.b32.xlu0 %v324, 24
      %v822 = vpop.permute.xlu0 %821
      %823 = vrot.lane.b32.xlu0 %v325, 24
      %v824 = vpop.permute.xlu0 %823
      %825 = vrot.lane.b32.xlu0 %v326, 24
      %v826 = vpop.permute.xlu0 %825
      %827 = vrot.lane.b32.xlu0 %v327, 24
      %v828 = vpop.permute.xlu0 %827
      %829 = vrot.lane.b32.xlu0 %v328, 24
      %v830 = vpop.permute.xlu0 %829
      %831 = vrot.lane.b32.xlu0 %v329, 24
      %v832 = vpop.permute.xlu0 %831
      %833 = vrot.lane.b32.xlu0 %v330, 24
      %v834 = vpop.permute.xlu0 %833
      %835 = vrot.lane.b32.xlu0 %v331, 24
      %v836 = vpop.permute.xlu0 %835
      %837 = vrot.lane.b32.xlu0 %v332, 24
      %v838 = vpop.permute.xlu0 %837
      %839 = vrot.lane.b32.xlu0 %v691, 24
      %v840 = vpop.permute.xlu0 %839
      %841 = vrot.lane.b32.xlu0 %v810, 24
      %v842 = vpop.permute.xlu0 %841
      %v844 = vunpack.c.l.b16 %v252
      %v845 = vpack.c.b16 %v844, %v844
      %v847 = vshrl.u32 %v810, 16
      %v849 = vshll.u32 %v810, 16
      %v851 = vrot.slane %v849, 1
      %v852 = vor.u32 %v847, %v851
      %v854 = vshll.u32 %v845, 16
      %v856 = vrot.slane %v854, 1
      %v857 = vsel %vm381, %v852, %v856
      %858 = vrot.lane.b32.xlu0 %v417, 28
      %v859 = vpop.permute.xlu0 %858
      %860 = vrot.lane.b32.xlu0 %v429, 28
      %v861 = vpop.permute.xlu0 %860
      %862 = vrot.lane.b32.xlu0 %v441, 28
      %v863 = vpop.permute.xlu0 %862
      %864 = vrot.lane.b32.xlu0 %v453, 28
      %v865 = vpop.permute.xlu0 %864
      %866 = vrot.lane.b32.xlu0 %v465, 28
      %v867 = vpop.permute.xlu0 %866
      %868 = vrot.lane.b32.xlu0 %v477, 28
      %v869 = vpop.permute.xlu0 %868
      %870 = vrot.lane.b32.xlu0 %v489, 28
      %v871 = vpop.permute.xlu0 %870
      %872 = vrot.lane.b32.xlu0 %v501, 28
      %v873 = vpop.permute.xlu0 %872
      %874 = vrot.lane.b32.xlu0 %v513, 28
      %v875 = vpop.permute.xlu0 %874
      %876 = vrot.lane.b32.xlu0 %v525, 28
      %v877 = vpop.permute.xlu0 %876
      %878 = vrot.lane.b32.xlu0 %v537, 28
      %v879 = vpop.permute.xlu0 %878
      %880 = vrot.lane.b32.xlu0 %v549, 28
      %v881 = vpop.permute.xlu0 %880
      %882 = vrot.lane.b32.xlu0 %v561, 28
      %v883 = vpop.permute.xlu0 %882
      %884 = vrot.lane.b32.xlu0 %v573, 28
      %v885 = vpop.permute.xlu0 %884
      %886 = vrot.lane.b32.xlu0 %v738, 28
      %v887 = vpop.permute.xlu0 %886
      %888 = vrot.lane.b32.xlu0 %v857, 28
      %v889 = vpop.permute.xlu0 %888
      %v890 = vrot.slane %v810, 1
      %v891 = vrot.slane %v845, 1
      %v892 = vsel %vm606, %v890, %v891
      %893 = vrot.lane.b32.xlu0 %v615, 32
      %v894 = vpop.permute.xlu0 %893
      %895 = vrot.lane.b32.xlu0 %v618, 32
      %v896 = vpop.permute.xlu0 %895
      %897 = vrot.lane.b32.xlu0 %v621, 32
      %v898 = vpop.permute.xlu0 %897
      %899 = vrot.lane.b32.xlu0 %v624, 32
      %v900 = vpop.permute.xlu0 %899
      %901 = vrot.lane.b32.xlu0 %v627, 32
      %v902 = vpop.permute.xlu0 %901
      %903 = vrot.lane.b32.xlu0 %v630, 32
      %v904 = vpop.permute.xlu0 %903
      %905 = vrot.lane.b32.xlu0 %v633, 32
      %v906 = vpop.permute.xlu0 %905
      %907 = vrot.lane.b32.xlu0 %v636, 32
      %v908 = vpop.permute.xlu0 %907
      %909 = vrot.lane.b32.xlu0 %v639, 32
      %v910 = vpop.permute.xlu0 %909
      %911 = vrot.lane.b32.xlu0 %v642, 32
      %v912 = vpop.permute.xlu0 %911
      %913 = vrot.lane.b32.xlu0 %v645, 32
      %v914 = vpop.permute.xlu0 %913
      %915 = vrot.lane.b32.xlu0 %v648, 32
      %v916 = vpop.permute.xlu0 %915
      %917 = vrot.lane.b32.xlu0 %v651, 32
      %v918 = vpop.permute.xlu0 %917
      %919 = vrot.lane.b32.xlu0 %v654, 32
      %v920 = vpop.permute.xlu0 %919
      %921 = vrot.lane.b32.xlu0 %v773, 32
      %v922 = vpop.permute.xlu0 %921
      %923 = vrot.lane.b32.xlu0 %v892, 32
      %v924 = vpop.permute.xlu0 %923
      %vm925 = vcmask 31744
      %v927 = vsel %vm925, %v317, %v575
      %v929 = vsel %vm925, %v318, %v577
      %v931 = vsel %vm925, %v319, %v579
      %v933 = vsel %vm925, %v320, %v581
      %v935 = vsel %vm925, %v321, %v583
      %v937 = vsel %vm925, %v322, %v585
      %v939 = vsel %vm925, %v323, %v587
      %v941 = vsel %vm925, %v324, %v589
      %v943 = vsel %vm925, %v325, %v591
      %v945 = vsel %vm925, %v326, %v593
      %v947 = vsel %vm925, %v327, %v595
      %v949 = vsel %vm925, %v328, %v597
      %v951 = vsel %vm925, %v329, %v599
      %v953 = vsel %vm925, %v330, %v601
      %v955 = vsel %vm925, %v331, %v603
      %v957 = vsel %vm925, %v332, %v605
      %vm958 = vcmask 64512
      %v960 = vsel %vm958, %v927, %v656
      %v962 = vsel %vm958, %v929, %v658
      %v964 = vsel %vm958, %v931, %v660
      %v966 = vsel %vm958, %v933, %v662
      %v968 = vsel %vm958, %v935, %v664
      %v970 = vsel %vm958, %v937, %v666
      %v972 = vsel %vm958, %v939, %v668
      %v974 = vsel %vm958, %v941, %v670
      %v976 = vsel %vm958, %v943, %v672
      %v978 = vsel %vm958, %v945, %v674
      %v980 = vsel %vm958, %v947, %v676
      %v982 = vsel %vm958, %v949, %v678
      %v984 = vsel %vm958, %v951, %v680
      %v986 = vsel %vm958, %v953, %v682
      %v988 = vsel %vm958, %v955, %v684
      %v990 = vsel %vm958, %v957, %v686
      %vm991 = vcmask 97280
      %v993 = vsel %vm991, %v960, %v693
      %v995 = vsel %vm991, %v962, %v695
      %v997 = vsel %vm991, %v964, %v697
      %v999 = vsel %vm991, %v966, %v699
      %v1001 = vsel %vm991, %v968, %v701
      %v1003 = vsel %vm991, %v970, %v703
      %v1005 = vsel %vm991, %v972, %v705
      %v1007 = vsel %vm991, %v974, %v707
      %v1009 = vsel %vm991, %v976, %v709
      %v1011 = vsel %vm991, %v978, %v711
      %v1013 = vsel %vm991, %v980, %v713
      %v1015 = vsel %vm991, %v982, %v715
      %v1017 = vsel %vm991, %v984, %v717
      %v1019 = vsel %vm991, %v986, %v719
      %v1021 = vsel %vm991, %v988, %v721
      %v1023 = vsel %vm991, %v990, %v723
      %vm1024 = vcmask 130048
      %v1026 = vsel %vm1024, %v993, %v740
      %v1028 = vsel %vm1024, %v995, %v742
      %v1030 = vsel %vm1024, %v997, %v744
      %v1032 = vsel %vm1024, %v999, %v746
      %v1034 = vsel %vm1024, %v1001, %v748
      %v1036 = vsel %vm1024, %v1003, %v750
      %v1038 = vsel %vm1024, %v1005, %v752
      %v1040 = vsel %vm1024, %v1007, %v754
      %v1042 = vsel %vm1024, %v1009, %v756
      %v1044 = vsel %vm1024, %v1011, %v758
      %v1046 = vsel %vm1024, %v1013, %v760
      %v1048 = vsel %vm1024, %v1015, %v762
      %v1050 = vsel %vm1024, %v1017, %v764
      %v1052 = vsel %vm1024, %v1019, %v766
      %v1054 = vsel %vm1024, %v1021, %v768
      %v1056 = vsel %vm1024, %v1023, %v770
      %vm1057 = vcmask 162816
      %v1059 = vsel %vm1057, %v1026, %v775
      %v1061 = vsel %vm1057, %v1028, %v777
      %v1063 = vsel %vm1057, %v1030, %v779
      %v1065 = vsel %vm1057, %v1032, %v781
      %v1067 = vsel %vm1057, %v1034, %v783
      %v1069 = vsel %vm1057, %v1036, %v785
      %v1071 = vsel %vm1057, %v1038, %v787
      %v1073 = vsel %vm1057, %v1040, %v789
      %v1075 = vsel %vm1057, %v1042, %v791
      %v1077 = vsel %vm1057, %v1044, %v793
      %v1079 = vsel %vm1057, %v1046, %v795
      %v1081 = vsel %vm1057, %v1048, %v797
      %v1083 = vsel %vm1057, %v1050, %v799
      %v1085 = vsel %vm1057, %v1052, %v801
      %v1087 = vsel %vm1057, %v1054, %v803
      %v1089 = vsel %vm1057, %v1056, %v805
      %vm1090 = vcmask 195584
      %v1092 = vsel %vm1090, %v1059, %v812
      %v1094 = vsel %vm1090, %v1061, %v814
      %v1096 = vsel %vm1090, %v1063, %v816
      %v1098 = vsel %vm1090, %v1065, %v818
      %v1100 = vsel %vm1090, %v1067, %v820
      %v1102 = vsel %vm1090, %v1069, %v822
      %v1104 = vsel %vm1090, %v1071, %v824
      %v1106 = vsel %vm1090, %v1073, %v826
      %v1108 = vsel %vm1090, %v1075, %v828
      %v1110 = vsel %vm1090, %v1077, %v830
      %v1112 = vsel %vm1090, %v1079, %v832
      %v1114 = vsel %vm1090, %v1081, %v834
      %v1116 = vsel %vm1090, %v1083, %v836
      %v1118 = vsel %vm1090, %v1085, %v838
      %v1120 = vsel %vm1090, %v1087, %v840
      %v1122 = vsel %vm1090, %v1089, %v842
      %vm1123 = vcmask 228352
      %v1125 = vsel %vm1123, %v1092, %v859
      %v1127 = vsel %vm1123, %v1094, %v861
      %v1129 = vsel %vm1123, %v1096, %v863
      %v1131 = vsel %vm1123, %v1098, %v865
      %v1133 = vsel %vm1123, %v1100, %v867
      %v1135 = vsel %vm1123, %v1102, %v869
      %v1137 = vsel %vm1123, %v1104, %v871
      %v1139 = vsel %vm1123, %v1106, %v873
      %v1141 = vsel %vm1123, %v1108, %v875
      %v1143 = vsel %vm1123, %v1110, %v877
      %v1145 = vsel %vm1123, %v1112, %v879
      %v1147 = vsel %vm1123, %v1114, %v881
      %v1149 = vsel %vm1123, %v1116, %v883
      %v1151 = vsel %vm1123, %v1118, %v885
      %v1153 = vsel %vm1123, %v1120, %v887
      %v1155 = vsel %vm1123, %v1122, %v889
      %vm1156 = vcmask 261120
      %v1158 = vsel %vm1156, %v1125, %v894
      %v1161 = vsel %vm1156, %v1127, %v896
      %v1164 = vsel %vm1156, %v1129, %v898
      %v1167 = vsel %vm1156, %v1131, %v900
      %v1170 = vsel %vm1156, %v1133, %v902
      %v1173 = vsel %vm1156, %v1135, %v904
      %v1176 = vsel %vm1156, %v1137, %v906
      %v1179 = vsel %vm1156, %v1139, %v908
      %v1182 = vsel %vm1156, %v1141, %v910
      %v1185 = vsel %vm1156, %v1143, %v912
      %v1188 = vsel %vm1156, %v1145, %v914
      %v1191 = vsel %vm1156, %v1147, %v916
      %v1194 = vsel %vm1156, %v1149, %v918
      %v1197 = vsel %vm1156, %v1151, %v920
      %v1200 = vsel %vm1156, %v1153, %v922
      %v1203 = vsel %vm1156, %v1155, %v924
      %v1205 = vunpack.c.l.bf16 %v1158
      %v1206 = vunpack.c.h.bf16 %v1158
      %v1207 = vunpack.c.l.bf16 %v1161
      %v1208 = vunpack.c.h.bf16 %v1161
      %v1209 = vunpack.c.l.bf16 %v1164
      %v1210 = vunpack.c.h.bf16 %v1164
      %v1211 = vunpack.c.l.bf16 %v1167
      %v1212 = vunpack.c.h.bf16 %v1167
      %v1213 = vunpack.c.l.bf16 %v1170
      %v1214 = vunpack.c.h.bf16 %v1170
      %v1215 = vunpack.c.l.bf16 %v1173
      %v1216 = vunpack.c.h.bf16 %v1173
      %v1217 = vunpack.c.l.bf16 %v1176
      %v1218 = vunpack.c.h.bf16 %v1176
      %v1219 = vunpack.c.l.bf16 %v1179
      %v1220 = vunpack.c.h.bf16 %v1179
      %v1221 = vunpack.c.l.bf16 %v1182
      %v1222 = vunpack.c.h.bf16 %v1182
      %v1223 = vunpack.c.l.bf16 %v1185
      %v1224 = vunpack.c.h.bf16 %v1185
      %v1225 = vunpack.c.l.bf16 %v1188
      %v1226 = vunpack.c.h.bf16 %v1188
      %v1227 = vunpack.c.l.bf16 %v1191
      %v1228 = vunpack.c.h.bf16 %v1191
      %v1229 = vunpack.c.l.bf16 %v1194
      %v1230 = vunpack.c.h.bf16 %v1194
      %v1231 = vunpack.c.l.bf16 %v1197
      %v1232 = vunpack.c.h.bf16 %v1197
      %v1233 = vunpack.c.l.bf16 %v1200
      %v1234 = vunpack.c.h.bf16 %v1200
      %v1235 = vunpack.c.l.bf16 %v1203
      %v1236 = vunpack.c.h.bf16 %v1203
      %v1237 = vmax.f32 %v1205, 0.0
      %v1238 = vmax.f32 %v1206, 0.0
      %v1239 = vmax.f32 %v1207, 0.0
      %v1240 = vmax.f32 %v1208, 0.0
      %v1241 = vmax.f32 %v1209, 0.0
      %v1242 = vmax.f32 %v1210, 0.0
      %v1243 = vmax.f32 %v1211, 0.0
      %v1244 = vmax.f32 %v1212, 0.0
      %v1245 = vmax.f32 %v1213, 0.0
      %v1246 = vmax.f32 %v1214, 0.0
      %v1247 = vmax.f32 %v1215, 0.0
      %v1248 = vmax.f32 %v1216, 0.0
      %v1249 = vmax.f32 %v1217, 0.0
      %v1250 = vmax.f32 %v1218, 0.0
      %v1251 = vmax.f32 %v1219, 0.0
      %v1252 = vmax.f32 %v1220, 0.0
      %v1253 = vmax.f32 %v1221, 0.0
      %v1254 = vmax.f32 %v1222, 0.0
      %v1255 = vmax.f32 %v1223, 0.0
      %v1256 = vmax.f32 %v1224, 0.0
      %v1257 = vmax.f32 %v1225, 0.0
      %v1258 = vmax.f32 %v1226, 0.0
      %v1259 = vmax.f32 %v1227, 0.0
      %v1260 = vmax.f32 %v1228, 0.0
      %v1261 = vmax.f32 %v1229, 0.0
      %v1262 = vmax.f32 %v1230, 0.0
      %v1263 = vmax.f32 %v1231, 0.0
      %v1264 = vmax.f32 %v1232, 0.0
      %v1265 = vmax.f32 %v1233, 0.0
      %v1266 = vmax.f32 %v1234, 0.0
      %v1267 = vmax.f32 %v1235, 0.0
      %v1268 = vmax.f32 %v1236, 0.0
      %v1269 = vpack.c.bf16 %v1237, %v1237
      %v1270 = vpack.c.bf16 %v1238, %v1238
      %v1271 = vpack.c.bf16 %v1239, %v1239
      %v1272 = vpack.c.bf16 %v1240, %v1240
      %v1273 = vpack.c.bf16 %v1241, %v1241
      %v1274 = vpack.c.bf16 %v1242, %v1242
      %v1275 = vpack.c.bf16 %v1243, %v1243
      %v1276 = vpack.c.bf16 %v1244, %v1244
      %v1277 = vpack.c.bf16 %v1245, %v1245
      %v1278 = vpack.c.bf16 %v1246, %v1246
      %v1279 = vpack.c.bf16 %v1247, %v1247
      %v1280 = vpack.c.bf16 %v1248, %v1248
      %v1281 = vpack.c.bf16 %v1249, %v1249
      %v1282 = vpack.c.bf16 %v1250, %v1250
      %v1283 = vpack.c.bf16 %v1251, %v1251
      %v1284 = vpack.c.bf16 %v1252, %v1252
      %v1285 = vpack.c.bf16 %v1253, %v1253
      %v1286 = vpack.c.bf16 %v1254, %v1254
      %v1287 = vpack.c.bf16 %v1255, %v1255
      %v1288 = vpack.c.bf16 %v1256, %v1256
      %v1289 = vpack.c.bf16 %v1257, %v1257
      %v1290 = vpack.c.bf16 %v1258, %v1258
      %v1291 = vpack.c.bf16 %v1259, %v1259
      %v1292 = vpack.c.bf16 %v1260, %v1260
      %v1293 = vpack.c.bf16 %v1261, %v1261
      %v1294 = vpack.c.bf16 %v1262, %v1262
      %v1295 = vpack.c.bf16 %v1263, %v1263
      %v1296 = vpack.c.bf16 %v1264, %v1264
      %v1297 = vpack.c.bf16 %v1265, %v1265
      %v1298 = vpack.c.bf16 %v1266, %v1266
      %v1299 = vpack.c.bf16 %v1267, %v1267
      %v1300 = vpack.c.bf16 %v1268, %v1268
      %v1301 = vld [vmem:[%s1] sm:$0xf]
      %v1302 = vld [vmem:[%s1 + $0x4] sm:$0xf]
      %v1303 = vld [vmem:[%s1 + $0x8] sm:$0xf]
      %v1304 = vld [vmem:[%s1 + $0xc] sm:$0xf]
      %v1305 = vld [vmem:[%s1 + $0x10] sm:$0x3]
      %v1338 = vunpack.c.l.b16 %v1269
      %v1339 = vunpack.c.l.b16 %v1270
      %v1340 = vunpack.c.l.b16 %v1271
      %v1341 = vunpack.c.l.b16 %v1272
      %v1342 = vunpack.c.l.b16 %v1273
      %v1343 = vunpack.c.l.b16 %v1274
      %v1344 = vunpack.c.l.b16 %v1275
      %v1345 = vunpack.c.l.b16 %v1276
      %v1346 = vunpack.c.l.b16 %v1277
      %v1347 = vunpack.c.l.b16 %v1278
      %v1348 = vunpack.c.l.b16 %v1279
      %v1349 = vunpack.c.l.b16 %v1280
      %v1350 = vunpack.c.l.b16 %v1281
      %v1351 = vunpack.c.l.b16 %v1282
      %v1352 = vunpack.c.l.b16 %v1283
      %v1353 = vunpack.c.l.b16 %v1284
      %v1354 = vunpack.c.l.b16 %v1285
      %v1355 = vunpack.c.l.b16 %v1286
      %v1356 = vunpack.c.l.b16 %v1287
      %v1357 = vunpack.c.l.b16 %v1288
      %v1358 = vunpack.c.l.b16 %v1289
      %v1359 = vunpack.c.l.b16 %v1290
      %v1360 = vunpack.c.l.b16 %v1291
      %v1361 = vunpack.c.l.b16 %v1292
      %v1362 = vunpack.c.l.b16 %v1293
      %v1363 = vunpack.c.l.b16 %v1294
      %v1364 = vunpack.c.l.b16 %v1295
      %v1365 = vunpack.c.l.b16 %v1296
      %v1366 = vunpack.c.l.b16 %v1297
      %v1367 = vunpack.c.l.b16 %v1298
      %v1368 = vunpack.c.l.b16 %v1299
      %v1369 = vunpack.c.l.b16 %v1300
      %v1370 = vpack.c.b16 %v1339, %v1338
      %v1371 = vpack.c.b16 %v1341, %v1340
      %v1372 = vpack.c.b16 %v1343, %v1342
      %v1373 = vpack.c.b16 %v1345, %v1344
      %v1374 = vpack.c.b16 %v1347, %v1346
      %v1375 = vpack.c.b16 %v1349, %v1348
      %v1376 = vpack.c.b16 %v1351, %v1350
      %v1377 = vpack.c.b16 %v1353, %v1352
      %v1378 = vpack.c.b16 %v1355, %v1354
      %v1379 = vpack.c.b16 %v1357, %v1356
      %v1380 = vpack.c.b16 %v1359, %v1358
      %v1381 = vpack.c.b16 %v1361, %v1360
      %v1382 = vpack.c.b16 %v1363, %v1362
      %v1383 = vpack.c.b16 %v1365, %v1364
      %v1384 = vpack.c.b16 %v1367, %v1366
      %v1385 = vpack.c.b16 %v1369, %v1368
      %v1391 = vunpack.c.l.b16 %v1301
      %v1392 = vunpack.c.l.b16 %v1302
      %v1393 = vunpack.c.l.b16 %v1303
      %v1394 = vunpack.c.l.b16 %v1304
      %v1395 = vunpack.c.l.b16 %v1305
      %v1396 = vpack.c.b16 %v1392, %v1391
      %v1397 = vpack.c.b16 %v1394, %v1393
      %v1398 = vpack.c.b16 %v1395, %v1395
      %vm1401 = vcmask 293888
      %v1403 = vsel %vm1401, %v1370, 0
      %v1406 = vsel %vm1401, %v1371, 0
      %v1409 = vsel %vm1401, %v1372, 0
      %v1412 = vsel %vm1401, %v1373, 0
      %v1415 = vsel %vm1401, %v1374, 0
      %v1418 = vsel %vm1401, %v1375, 0
      %v1421 = vsel %vm1401, %v1376, 0
      %v1424 = vsel %vm1401, %v1377, 0
      %v1427 = vsel %vm1401, %v1378, 0
      %v1430 = vsel %vm1401, %v1379, 0
      %v1433 = vsel %vm1401, %v1380, 0
      %v1436 = vsel %vm1401, %v1381, 0
      %v1439 = vsel %vm1401, %v1382, 0
      %v1442 = vsel %vm1401, %v1383, 0
      %v1445 = vsel %vm1401, %v1384, 0
      %v1448 = vsel %vm1401, %v1385, 0
      %vm1450 = vcmask 1041408
      %v1452 = vsel %vm1450, %v1398, 0
      %1454 = vmatpush.bf16.msra.mxu0 0
      %1455 = vmatpush.bf16.msra.mxu0 0
      %1456 = vmatpush.bf16.msra.mxu0 0
      %1457 = vmatpush.bf16.msra.mxu0 0
      %1458 = vmatpush.bf16.msra.mxu0 0
      %1459 = vmatpush.bf16.msra.mxu0 %v1452
      %1460 = vmatpush.bf16.msra.mxu0 %v1397
      %1461 = vmatpush.bf16.msra.mxu0 %v1396
      %1462 = vmatmul.bf16.gmra.mxu0 %v1403
      %v1463 = vpop.f32.mrf.mxu0
      %v1464 = vadd.f32 0.0, %v1463
      %v1465 = vpop.f32.mrf.mxu0
      %v1466 = vadd.f32 0.0, %v1465
      %1467 = vmatmul.bf16.gmra.mxu0 %v1406
      %v1468 = vpop.f32.mrf.mxu0
      %v1469 = vadd.f32 0.0, %v1468
      %v1470 = vpop.f32.mrf.mxu0
      %v1471 = vadd.f32 0.0, %v1470
      %1472 = vmatmul.bf16.gmra.mxu0 %v1409
      %v1473 = vpop.f32.mrf.mxu0
      %v1474 = vadd.f32 0.0, %v1473
      %v1475 = vpop.f32.mrf.mxu0
      %v1476 = vadd.f32 0.0, %v1475
      %1477 = vmatmul.bf16.gmra.mxu0 %v1412
      %v1478 = vpop.f32.mrf.mxu0
      %v1479 = vadd.f32 0.0, %v1478
      %v1480 = vpop.f32.mrf.mxu0
      %v1481 = vadd.f32 0.0, %v1480
      %1482 = vmatmul.bf16.gmra.mxu0 %v1415
      %v1483 = vpop.f32.mrf.mxu0
      %v1484 = vadd.f32 0.0, %v1483
      %v1485 = vpop.f32.mrf.mxu0
      %v1486 = vadd.f32 0.0, %v1485
      %1487 = vmatmul.bf16.gmra.mxu0 %v1418
      %v1488 = vpop.f32.mrf.mxu0
      %v1489 = vadd.f32 0.0, %v1488
      %v1490 = vpop.f32.mrf.mxu0
      %v1491 = vadd.f32 0.0, %v1490
      %1492 = vmatmul.bf16.gmra.mxu0 %v1421
      %v1493 = vpop.f32.mrf.mxu0
      %v1494 = vadd.f32 0.0, %v1493
      %v1495 = vpop.f32.mrf.mxu0
      %v1496 = vadd.f32 0.0, %v1495
      %1497 = vmatmul.bf16.gmra.mxu0 %v1424
      %v1498 = vpop.f32.mrf.mxu0
      %v1499 = vadd.f32 0.0, %v1498
      %v1500 = vpop.f32.mrf.mxu0
      %v1501 = vadd.f32 0.0, %v1500
      %1502 = vmatmul.bf16.gmra.mxu0 %v1427
      %v1503 = vpop.f32.mrf.mxu0
      %v1504 = vadd.f32 0.0, %v1503
      %v1505 = vpop.f32.mrf.mxu0
      %v1506 = vadd.f32 0.0, %v1505
      %1507 = vmatmul.bf16.gmra.mxu0 %v1430
      %v1508 = vpop.f32.mrf.mxu0
      %v1509 = vadd.f32 0.0, %v1508
      %v1510 = vpop.f32.mrf.mxu0
      %v1511 = vadd.f32 0.0, %v1510
      %1512 = vmatmul.bf16.gmra.mxu0 %v1433
      %v1513 = vpop.f32.mrf.mxu0
      %v1514 = vadd.f32 0.0, %v1513
      %v1515 = vpop.f32.mrf.mxu0
      %v1516 = vadd.f32 0.0, %v1515
      %1517 = vmatmul.bf16.gmra.mxu0 %v1436
      %v1518 = vpop.f32.mrf.mxu0
      %v1519 = vadd.f32 0.0, %v1518
      %v1520 = vpop.f32.mrf.mxu0
      %v1521 = vadd.f32 0.0, %v1520
      %1522 = vmatmul.bf16.gmra.mxu0 %v1439
      %v1523 = vpop.f32.mrf.mxu0
      %v1524 = vadd.f32 0.0, %v1523
      %v1525 = vpop.f32.mrf.mxu0
      %v1526 = vadd.f32 0.0, %v1525
      %1527 = vmatmul.bf16.gmra.mxu0 %v1442
      %v1528 = vpop.f32.mrf.mxu0
      %v1529 = vadd.f32 0.0, %v1528
      %v1530 = vpop.f32.mrf.mxu0
      %v1531 = vadd.f32 0.0, %v1530
      %1532 = vmatmul.bf16.gmra.mxu0 %v1445
      %v1533 = vpop.f32.mrf.mxu0
      %v1534 = vadd.f32 0.0, %v1533
      %v1535 = vpop.f32.mrf.mxu0
      %v1536 = vadd.f32 0.0, %v1535
      %1537 = vmatmul.bf16.gmra.mxu0 %v1448
      %v1538 = vpop.f32.mrf.mxu0
      %v1539 = vadd.f32 0.0, %v1538
      %v1540 = vpop.f32.mrf.mxu0
      %v1541 = vadd.f32 0.0, %v1540
      %1542 = vdwg.mxu0
      %v1543 = vld [vmem:[%s2] sm:$0x1]
      %v1545 = vperm.slane %v1543, 0
      %v1547 = vmul.f32 %v1464, %v1545
      %v1548 = vmul.f32 %v1466, %v1545
      %v1549 = vmul.f32 %v1469, %v1545
      %v1550 = vmul.f32 %v1471, %v1545
      %v1551 = vmul.f32 %v1474, %v1545
      %v1552 = vmul.f32 %v1476, %v1545
      %v1553 = vmul.f32 %v1479, %v1545
      %v1554 = vmul.f32 %v1481, %v1545
      %v1555 = vmul.f32 %v1484, %v1545
      %v1556 = vmul.f32 %v1486, %v1545
      %v1557 = vmul.f32 %v1489, %v1545
      %v1558 = vmul.f32 %v1491, %v1545
      %v1559 = vmul.f32 %v1494, %v1545
      %v1560 = vmul.f32 %v1496, %v1545
      %v1561 = vmul.f32 %v1499, %v1545
      %v1562 = vmul.f32 %v1501, %v1545
      %v1563 = vmul.f32 %v1504, %v1545
      %v1564 = vmul.f32 %v1506, %v1545
      %v1565 = vmul.f32 %v1509, %v1545
      %v1566 = vmul.f32 %v1511, %v1545
      %v1567 = vmul.f32 %v1514, %v1545
      %v1568 = vmul.f32 %v1516, %v1545
      %v1569 = vmul.f32 %v1519, %v1545
      %v1570 = vmul.f32 %v1521, %v1545
      %v1571 = vmul.f32 %v1524, %v1545
      %v1572 = vmul.f32 %v1526, %v1545
      %v1573 = vmul.f32 %v1529, %v1545
      %v1574 = vmul.f32 %v1531, %v1545
      %v1575 = vmul.f32 %v1534, %v1545
      %v1576 = vmul.f32 %v1536, %v1545
      %v1577 = vmul.f32 %v1539, %v1545
      %v1578 = vmul.f32 %v1541, %v1545
      %v1579 = vld [vmem:[%s3] sm:$0x1]
      %v1581 = vperm.slane %v1579, 0
      %v1583 = vadd.f32 %v1547, %v1581
      %v1584 = vadd.f32 %v1548, %v1581
      %v1585 = vadd.f32 %v1549, %v1581
      %v1586 = vadd.f32 %v1550, %v1581
      %v1587 = vadd.f32 %v1551, %v1581
      %v1588 = vadd.f32 %v1552, %v1581
      %v1589 = vadd.f32 %v1553, %v1581
      %v1590 = vadd.f32 %v1554, %v1581
      %v1591 = vadd.f32 %v1555, %v1581
      %v1592 = vadd.f32 %v1556, %v1581
      %v1593 = vadd.f32 %v1557, %v1581
      %v1594 = vadd.f32 %v1558, %v1581
      %v1595 = vadd.f32 %v1559, %v1581
      %v1596 = vadd.f32 %v1560, %v1581
      %v1597 = vadd.f32 %v1561, %v1581
      %v1598 = vadd.f32 %v1562, %v1581
      %v1599 = vadd.f32 %v1563, %v1581
      %v1600 = vadd.f32 %v1564, %v1581
      %v1601 = vadd.f32 %v1565, %v1581
      %v1602 = vadd.f32 %v1566, %v1581
      %v1603 = vadd.f32 %v1567, %v1581
      %v1604 = vadd.f32 %v1568, %v1581
      %v1605 = vadd.f32 %v1569, %v1581
      %v1606 = vadd.f32 %v1570, %v1581
      %v1607 = vadd.f32 %v1571, %v1581
      %v1608 = vadd.f32 %v1572, %v1581
      %v1609 = vadd.f32 %v1573, %v1581
      %v1610 = vadd.f32 %v1574, %v1581
      %v1611 = vadd.f32 %v1575, %v1581
      %v1612 = vadd.f32 %v1576, %v1581
      %v1613 = vadd.f32 %v1577, %v1581
      %v1614 = vadd.f32 %v1578, %v1581
      %1615 = vxpose.xlu0.b32.start [1/16] %v1583, 128
      %1616 = vxpose.xlu0.b32.cont [2/16] %v1584, 128
      %1617 = vxpose.xlu0.b32.cont [3/16] %v1585, 128
      %1618 = vxpose.xlu0.b32.cont [4/16] %v1586, 128
      %1619 = vxpose.xlu0.b32.cont [5/16] %v1587, 128
      %1620 = vxpose.xlu0.b32.cont [6/16] %v1588, 128
      %1621 = vxpose.xlu0.b32.cont [7/16] %v1589, 128
      %1622 = vxpose.xlu0.b32.cont [8/16] %v1590, 128
      %1623 = vxpose.xlu0.b32.cont [9/16] %v1591, 128
      %1624 = vxpose.xlu0.b32.cont [10/16] %v1592, 128
      %1625 = vxpose.xlu0.b32.cont [11/16] %v1593, 128
      %1626 = vxpose.xlu0.b32.cont [12/16] %v1594, 128
      %1627 = vxpose.xlu0.b32.cont [13/16] %v1595, 128
      %1628 = vxpose.xlu0.b32.cont [14/16] %v1596, 128
      %1629 = vxpose.xlu0.b32.cont [15/16] %v1597, 128
      %1630 = vxpose.xlu0.b32.end [16/16] %v1598, 128
      %v1631 = vpop.trf.xlu0
      %v1632 = vpop.trf.xlu0
      %v1633 = vpop.trf.xlu0
      %v1634 = vpop.trf.xlu0
      %v1635 = vpop.trf.xlu0
      %v1636 = vpop.trf.xlu0
      %v1637 = vpop.trf.xlu0
      %v1638 = vpop.trf.xlu0
      %v1639 = vpop.trf.xlu0
      %v1640 = vpop.trf.xlu0
      %v1641 = vpop.trf.xlu0
      %v1642 = vpop.trf.xlu0
      %v1643 = vpop.trf.xlu0
      %v1644 = vpop.trf.xlu0
      %v1645 = vpop.trf.xlu0
      %v1646 = vpop.trf.xlu0
      %1647 = vxpose.xlu0.b32.start [1/16] %v1599, 128
      %1648 = vxpose.xlu0.b32.cont [2/16] %v1600, 128
      %1649 = vxpose.xlu0.b32.cont [3/16] %v1601, 128
      %1650 = vxpose.xlu0.b32.cont [4/16] %v1602, 128
      %1651 = vxpose.xlu0.b32.cont [5/16] %v1603, 128
      %1652 = vxpose.xlu0.b32.cont [6/16] %v1604, 128
      %1653 = vxpose.xlu0.b32.cont [7/16] %v1605, 128
      %1654 = vxpose.xlu0.b32.cont [8/16] %v1606, 128
      %1655 = vxpose.xlu0.b32.cont [9/16] %v1607, 128
      %1656 = vxpose.xlu0.b32.cont [10/16] %v1608, 128
      %1657 = vxpose.xlu0.b32.cont [11/16] %v1609, 128
      %1658 = vxpose.xlu0.b32.cont [12/16] %v1610, 128
      %1659 = vxpose.xlu0.b32.cont [13/16] %v1611, 128
      %1660 = vxpose.xlu0.b32.cont [14/16] %v1612, 128
      %1661 = vxpose.xlu0.b32.cont [15/16] %v1613, 128
      %1662 = vxpose.xlu0.b32.end [16/16] %v1614, 128
      %v1663 = vpop.trf.xlu0
      %v1664 = vpop.trf.xlu0
      %v1665 = vpop.trf.xlu0
      %v1666 = vpop.trf.xlu0
      %v1667 = vpop.trf.xlu0
      %v1668 = vpop.trf.xlu0
      %v1669 = vpop.trf.xlu0
      %v1670 = vpop.trf.xlu0
      %v1671 = vpop.trf.xlu0
      %v1672 = vpop.trf.xlu0
      %v1673 = vpop.trf.xlu0
      %v1674 = vpop.trf.xlu0
      %v1675 = vpop.trf.xlu0
      %v1676 = vpop.trf.xlu0
      %v1677 = vpop.trf.xlu0
      %v1678 = vpop.trf.xlu0
      %1679 = vst [vmem:[%s197] sm:$0xff] %v1631
      %1680 = vst [vmem:[%s197 + $0x8] sm:$0xff] %v1663
      %p1681 = scmp.lt.s32.totalorder %s15, 1
      %s1682 = scalar_select %p1681, %s15, 1
      %s1683 = smul.addr %s1682, 2
      %s1684 = smul.addr %s1683, 8
      %s1685 = scalar_lea.vmem %s4, %s1684
      // Predicated region
      $region37: #{relu_conv_bn.3} parent=35 // pred_check
        %p1686 = pneg %p122
      $region38: #{relu_conv_bn.3} parent=35 // pred_check_branch
        %1688 = sbr.rel (%p1686) target = $region40
      $region39: #{relu_conv_bn.3} parent=35 // pred_region
        _
      $region40: #{relu_conv_bn.3} parent=35 // pred_fallthru
        _
    $region36: #{relu_conv_bn.3} parent=5 // pred_fallthru
      _
    %p1689 = scmp.le.s32.totalorder 2, %s10
    // Predicated region
    $region41: #{relu_conv_bn.3} parent=5 // pred_check
      %p1690 = pneg %p1689
    $region42: #{relu_conv_bn.3} parent=5 // pred_check_branch
      %1692 = sbr.rel (%p1690) target = $region44
    $region43: #{relu_conv_bn.3} parent=5 // pred_region
      %s1693 = ssub.s32 %s10, 2
      // Predicated region
      $region45: #{relu_conv_bn.3} parent=43 // pred_check
        %p1694 = pneg %p128
      $region46: #{relu_conv_bn.3} parent=43 // pred_check_branch
        %1696 = sbr.rel (%p1694) target = $region48
      $region47: #{relu_conv_bn.3} parent=43 // pred_region
        %p1697 = scmp.lt.s32.totalorder %s16, 1
        %s1698 = scalar_select %p1697, %s16, 1
        %s1699 = smul.addr %s1698, 2
        %s1700 = smul.addr %s1699, 8
        %s1701 = scalar_lea.vmem %s4, %s1700
      $region48: #{relu_conv_bn.3} parent=43 // pred_fallthru
        _
    $region44: #{relu_conv_bn.3} parent=5 // pred_fallthru
      _
  $region6: #{relu_conv_bn.3} parent=0 // loop_footer
    %s14 = sadd.s32 1, %s10
  $region7: #{relu_conv_bn.3} parent=0 // loop_footer_branch
    %9 = sbr.rel target = $region3
  $region8: #{relu_conv_bn.3} parent=0 // loop_exit
    _

</llo_original>
